<compile_context>
chip_gen: v5e
topology: v5e:2x2
jax: 0.10.0
libtpu: 0.0.40
codegen_flags: <defaults>
</compile_context>

<pallas_src>
import jax
import jax.numpy as jnp
from jax.experimental import pallas as pl
from jax.experimental.pallas import tpu as pltpu

INV_LRELU_ALPHA = 0.9   # InvLeakyRelu default alpha used by the flow block ('lrelu')
LRELU_SLOPE = 0.01      # nn.LeakyReLU default slope inside BasicFullyConnectedNet
N_NETS = 4              # s[0], s[1], t[0], t[1]


def _flow_block_kernel(xh_ref, xc_ref, w0a_ref, w0c_ref, wh_ref, w3_ref,
                       bh_ref, b3_ref, an_ref, pm_ref, out_ref):
    f32 = jnp.float32
    a = xh_ref[0].astype(f32)          # (B, C//2)  first half of x
    b = xh_ref[1].astype(f32)          # (B, C//2)  second half of x
    xc = xc_ref[...].astype(f32)       # (B, Cc)    conditioning vector
    B = a.shape[0]
    C = pm_ref.shape[-1]

    # ---- ActNorm (spatial extent 1x1): h = scale * (x + loc); logdet = sum(log|scale|)
    loc_a, scale_a = an_ref[0], an_ref[1]          # (1, C//2)
    loc_b, scale_b = an_ref[2], an_ref[3]          # (1, C//2)
    a = scale_a * (a + loc_a)
    b = scale_b * (b + loc_b)
    ld_an = (jnp.sum(jnp.log(jnp.abs(scale_a)), axis=-1, keepdims=True) +
             jnp.sum(jnp.log(jnp.abs(scale_b)), axis=-1, keepdims=True))    # (1, 1)
    logdet = jnp.zeros((B, 1), f32) + ld_an                                 # (B, 1)

    # ---- InvLeakyRelu(alpha=0.9) forward (its logdet contribution is 0.0 in the reference)
    a = jnp.where(a >= 0, a, INV_LRELU_ALPHA * a)
    b = jnp.where(b >= 0, b, INV_LRELU_ALPHA * b)

    def lrelu(y):
        return jnp.where(y > 0, y, LRELU_SLOPE * y)

    def mlp(z_half, net, use_tanh):
        # BasicFullyConnectedNet(depth=2) applied to cat([z_half, xcond], dim=1).
        # The concat is folded into a split first-layer matmul (no in-kernel lane concat).
        y = (jnp.dot(z_half, w0a_ref[net], preferred_element_type=f32) +
             jnp.dot(xc, w0c_ref[net], preferred_element_type=f32) +
             bh_ref[3 * net + 0])
        y = lrelu(y)
        y = jnp.dot(y, wh_ref[2 * net + 0], preferred_element_type=f32) + bh_ref[3 * net + 1]
        y = lrelu(y)
        y = jnp.dot(y, wh_ref[2 * net + 1], preferred_element_type=f32) + bh_ref[3 * net + 2]
        y = lrelu(y)
        y = jnp.dot(y, w3_ref[net], preferred_element_type=f32) + b3_ref[net]
        return jnp.tanh(y) if use_tanh else y

    # ---- ConditionalDoubleVectorCouplingBlock forward (statically unrolled, 2 steps)
    # step 0: condition on first half `a`, affine-transform second half `b`
    s0 = mlp(a, 0, use_tanh=True)      # self.s[0]
    t0 = mlp(a, 2, use_tanh=False)     # self.t[0]
    b = b * jnp.exp(s0) + t0
    logdet = logdet + jnp.sum(s0, axis=-1, keepdims=True)
    # step 1: halves are swapped -> condition on `b`, transform `a`
    s1 = mlp(b, 1, use_tanh=True)      # self.s[1]
    t1 = mlp(b, 3, use_tanh=False)     # self.t[1]
    a = a * jnp.exp(s1) + t1
    logdet = logdet + jnp.sum(s1, axis=-1, keepdims=True)

    # ---- Shuffle: after the couplings x == [b, a]; the fixed channel permutation is
    # applied as a matmul with the row-split one-hot permutation matrix (logdet = 0).
    h = (jnp.dot(b, pm_ref[0], preferred_element_type=f32) +
         jnp.dot(a, pm_ref[1], preferred_element_type=f32))                 # (B, C)

    out_ref[:, 0:C] = h
    out_ref[:, C:C + 1] = logdet


def pack_params(nets, an_loc, an_scale, perm_idx, in_channels):
    """nets = [s0, s1, t0, t1]; each net = (W0, b0, W1, b1, W2, b2, W3, b3) with W*
    shaped (fan_in, fan_out), b* 1-D.  Returns the stacked kernel parameter operands."""
    C = in_channels
    half = C // 2
    f32 = jnp.float32
    w0a = jnp.stack([n[0][:half] for n in nets]).astype(f32)                  # (4, C//2, H)
    w0c = jnp.stack([n[0][half:] for n in nets]).astype(f32)                  # (4, Cc,   H)
    wh = jnp.stack([w for n in nets for w in (n[2], n[4])]).astype(f32)       # (8, H, H)
    w3 = jnp.stack([n[6] for n in nets]).astype(f32)                          # (4, H, C//2)
    bh = jnp.stack([bb[None, :] for n in nets
                    for bb in (n[1], n[3], n[5])]).astype(f32)                # (12, 1, H)
    b3 = jnp.stack([n[7][None, :] for n in nets]).astype(f32)                 # (4, 1, C//2)
    an = jnp.stack([an_loc[None, :half], an_scale[None, :half],
                    an_loc[None, half:], an_scale[None, half:]]).astype(f32)  # (4, 1, C//2)
    perm_mat = jnp.transpose(jnp.eye(C, dtype=f32)[perm_idx])                 # (C, C) one-hot
    pm = jnp.stack([perm_mat[:half], perm_mat[half:]])                        # (2, C//2, C)
    return (w0a, w0c, wh, w3, bh, b3, an, pm)


def conditional_flat_double_coupling_forward(x, xcond, packed):
    """Forward of ConditionalFlatDoubleCouplingFlowBlock.
    x: (B, C, 1, 1), xcond: (B, Cc, 1, 1).  Returns (h of shape (B, C), logdet of shape (B,))."""
    B, C, Hs, Ws = x.shape
    assert Hs == 1 and Ws == 1, "flat flow block: spatial dims must be singleton"
    Bc, Cc, Hc, Wc = xcond.shape
    assert Hc == 1 and Wc == 1 and Bc == B
    half = C // 2

    x2d = x.reshape(B, C).astype(jnp.float32)
    xh = jnp.stack([x2d[:, :half], x2d[:, half:]])            # (2, B, C//2)
    xc2d = xcond.reshape(B, Cc).astype(jnp.float32)

    vmem = pl.BlockSpec(memory_space=pltpu.MemorySpace.VMEM)
    out = pl.pallas_call(
        _flow_block_kernel,
        out_shape=jax.ShapeDtypeStruct((B, C + 1), jnp.float32),
        in_specs=[vmem] * (2 + len(packed)),
        out_specs=vmem,
    )(xh, xc2d, *packed)

    h = out[:, :C].astype(x.dtype)
    logdet = out[:, C].astype(x.dtype)
    return h, logdet


# ---------------- pure-JAX reference (mirror of the PyTorch forward) ----------------
def _mlp_ref(z, p, use_tanh):
    W0, b0, W1, b1, W2, b2, W3, b3 = p
    y = z @ W0 + b0
    y = jnp.where(y > 0, y, LRELU_SLOPE * y)
    y = y @ W1 + b1
    y = jnp.where(y > 0, y, LRELU_SLOPE * y)
    y = y @ W2 + b2
    y = jnp.where(y > 0, y, LRELU_SLOPE * y)
    y = y @ W3 + b3
    return jnp.tanh(y) if use_tanh else y


def reference_forward(x, xcond, s_nets, t_nets, an_loc, an_scale, perm_idx):
    B, C = x.shape[0], x.shape[1]
    half = C // 2
    h = x.reshape(B, C).astype(jnp.float32)
    xc = xcond.reshape(B, -1).astype(jnp.float32)
    h = an_scale[None, :] * (h + an_loc[None, :])                       # ActNorm
    logdet = jnp.sum(jnp.log(jnp.abs(an_scale))) * jnp.ones((B,), jnp.float32)
    h = jnp.where(h >= 0, h, INV_LRELU_ALPHA * h)                       # InvLeakyRelu
    for i in range(2):                                                  # coupling
        if i % 2 != 0:
            h = jnp.concatenate([h[:, half:], h[:, :half]], axis=1)
        xa, xb = h[:, :half], h[:, half:]
        ci = jnp.concatenate([xa, xc], axis=1)
        s = _mlp_ref(ci, s_nets[i], use_tanh=True)
        t = _mlp_ref(ci, t_nets[i], use_tanh=False)
        xb = xb * jnp.exp(s) + t
        h = jnp.concatenate([xa, xb], axis=1)
        logdet = logdet + jnp.sum(s, axis=1)
    h = h[:, perm_idx]                                                  # Shuffle
    return h, logdet


if __name__ == "__main__":
    key = jax.random.PRNGKey(0)
    # Flat (1x1 spatial) vectors; B=8 fills a full sublane group per the perf review.
    B, C, COND_C, HIDDEN = 8, 4, 4, 32     # hidden_depth=2 -> 4 Linear layers per net
    half = C // 2
    ks = jax.random.split(key, 9)

    x = jax.random.normal(ks[0], (B, C, 1, 1), jnp.float32)
    xcond = jax.random.normal(ks[1], (B, COND_C, 1, 1), jnp.float32)

    def init_linear(k, fan_in, fan_out):
        kw, kb = jax.random.split(k)
        bound = 1.0 / (fan_in ** 0.5)            # PyTorch nn.Linear default init
        W = jax.random.uniform(kw, (fan_in, fan_out), jnp.float32, -bound, bound)
        bvec = jax.random.uniform(kb, (fan_out,), jnp.float32, -bound, bound)
        return W, bvec

    def init_net(k, dim_in, hidden, dim_out):
        k0, k1, k2, k3 = jax.random.split(k, 4)
        W0, b0 = init_linear(k0, dim_in, hidden)
        W1, b1 = init_linear(k1, hidden, hidden)
        W2, b2 = init_linear(k2, hidden, hidden)
        W3, b3 = init_linear(k3, hidden, dim_out)
        return (W0, b0, W1, b1, W2, b2, W3, b3)

    dim_in = half + COND_C                       # conditioner input = cat(x_half, xcond)
    s_nets = [init_net(ks[2], dim_in, HIDDEN, half), init_net(ks[3], dim_in, HIDDEN, half)]
    t_nets = [init_net(ks[4], dim_in, HIDDEN, half), init_net(ks[5], dim_in, HIDDEN, half)]

    # ActNorm parameters (PyTorch defaults are loc=0 / scale=1; nontrivial values here so
    # the logdet path is actually exercised).
    # TODO(synk): ActNorm's data-dependent initialization (first-batch mean/std hook) is a
    # training-time side effect and is not reproduced here.
    an_loc = 0.1 * jax.random.normal(ks[6], (C,), jnp.float32)
    an_scale = 1.0 + 0.1 * jax.random.normal(ks[7], (C,), jnp.float32)

    perm_idx = jax.random.permutation(ks[8], C)  # Shuffle's fixed random channel permutation

    packed = pack_params(s_nets + t_nets, an_loc, an_scale, perm_idx, C)
    h, logdet = conditional_flat_double_coupling_forward(x, xcond, packed)
    jax.block_until_ready((h, logdet))

    h_ref, ld_ref = reference_forward(x, xcond, s_nets, t_nets, an_loc, an_scale, perm_idx)
    assert h.shape == (B, C) and logdet.shape == (B,)
    assert jnp.allclose(h, h_ref, atol=1e-2, rtol=1e-2), "h mismatch vs pure-JAX reference"
    assert jnp.allclose(logdet, ld_ref, atol=1e-2, rtol=1e-2), "logdet mismatch vs reference"
    print("KERNEL_OK")
</pallas_src>

<mosaic_0001>
module attributes {stable_mosaic.version = 11 : i64} {
  func.func @_flow_block_kernel(%arg0: memref<2x8x2xf32, #tpu.memory_space<vmem>>, %arg1: memref<8x4xf32, #tpu.memory_space<vmem>>, %arg2: memref<4x2x32xf32, #tpu.memory_space<vmem>>, %arg3: memref<4x4x32xf32, #tpu.memory_space<vmem>>, %arg4: memref<8x32x32xf32, #tpu.memory_space<vmem>>, %arg5: memref<4x32x2xf32, #tpu.memory_space<vmem>>, %arg6: memref<12x1x32xf32, #tpu.memory_space<vmem>>, %arg7: memref<4x1x2xf32, #tpu.memory_space<vmem>>, %arg8: memref<4x1x2xf32, #tpu.memory_space<vmem>>, %arg9: memref<2x2x4xf32, #tpu.memory_space<vmem>>, %arg10: memref<8x5xf32, #tpu.memory_space<vmem>>) attributes {dimension_semantics = [], scalar_prefetch = 0 : i64, scratch_operands = 0 : i64, tpu.core_type = #tpu.core_type<tc>} {
    %c0 = arith.constant 0 : index
    %c0_0 = arith.constant 0 : index
    %c0_1 = arith.constant 0 : index
    %0 = vector.load %arg0[%c0, %c0_0, %c0_1] : memref<2x8x2xf32, #tpu.memory_space<vmem>>, vector<1x8x2xf32>
    %1 = vector.shape_cast %0 : vector<1x8x2xf32> to vector<8x2xf32>
    %c1 = arith.constant 1 : index
    %c0_2 = arith.constant 0 : index
    %c0_3 = arith.constant 0 : index
    %2 = vector.load %arg0[%c1, %c0_2, %c0_3] : memref<2x8x2xf32, #tpu.memory_space<vmem>>, vector<1x8x2xf32>
    %3 = vector.shape_cast %2 : vector<1x8x2xf32> to vector<8x2xf32>
    %c0_4 = arith.constant 0 : index
    %c0_5 = arith.constant 0 : index
    %4 = vector.load %arg1[%c0_4, %c0_5] : memref<8x4xf32, #tpu.memory_space<vmem>>, vector<8x4xf32>
    %c0_6 = arith.constant 0 : index
    %c0_7 = arith.constant 0 : index
    %c0_8 = arith.constant 0 : index
    %5 = vector.load %arg8[%c0_6, %c0_7, %c0_8] : memref<4x1x2xf32, #tpu.memory_space<vmem>>, vector<1x1x2xf32>
    %6 = vector.shape_cast %5 : vector<1x1x2xf32> to vector<1x2xf32>
    %c1_9 = arith.constant 1 : index
    %c0_10 = arith.constant 0 : index
    %c0_11 = arith.constant 0 : index
    %7 = vector.load %arg8[%c1_9, %c0_10, %c0_11] : memref<4x1x2xf32, #tpu.memory_space<vmem>>, vector<1x1x2xf32>
    %8 = vector.shape_cast %7 : vector<1x1x2xf32> to vector<1x2xf32>
    %c2 = arith.constant 2 : index
    %c0_12 = arith.constant 0 : index
    %c0_13 = arith.constant 0 : index
    %9 = vector.load %arg8[%c2, %c0_12, %c0_13] : memref<4x1x2xf32, #tpu.memory_space<vmem>>, vector<1x1x2xf32>
    %10 = vector.shape_cast %9 : vector<1x1x2xf32> to vector<1x2xf32>
    %c3 = arith.constant 3 : index
    %c0_14 = arith.constant 0 : index
    %c0_15 = arith.constant 0 : index
    %11 = vector.load %arg8[%c3, %c0_14, %c0_15] : memref<4x1x2xf32, #tpu.memory_space<vmem>>, vector<1x1x2xf32>
    %12 = vector.shape_cast %11 : vector<1x1x2xf32> to vector<1x2xf32>
    %13 = vector.broadcast %6 : vector<1x2xf32> to vector<8x2xf32>
    %14 = arith.addf %1, %13 : vector<8x2xf32>
    %15 = vector.broadcast %8 : vector<1x2xf32> to vector<8x2xf32>
    %16 = arith.mulf %15, %14 : vector<8x2xf32>
    %17 = vector.broadcast %10 : vector<1x2xf32> to vector<8x2xf32>
    %18 = arith.addf %3, %17 : vector<8x2xf32>
    %19 = vector.broadcast %12 : vector<1x2xf32> to vector<8x2xf32>
    %20 = arith.mulf %19, %18 : vector<8x2xf32>
    %21 = math.absf %8 : vector<1x2xf32>
    %22 = math.log %21 : vector<1x2xf32>
    %cst = arith.constant dense<0.000000e+00> : vector<1xf32>
    %23 = vector.multi_reduction <add>, %22, %cst [1] : vector<1x2xf32> to vector<1xf32>
    %24 = vector.shape_cast %23 : vector<1xf32> to vector<1x1xf32>
    %25 = math.absf %12 : vector<1x2xf32>
    %26 = math.log %25 : vector<1x2xf32>
    %cst_16 = arith.constant dense<0.000000e+00> : vector<1xf32>
    %27 = vector.multi_reduction <add>, %26, %cst_16 [1] : vector<1x2xf32> to vector<1xf32>
    %28 = vector.shape_cast %27 : vector<1xf32> to vector<1x1xf32>
    %29 = arith.addf %24, %28 : vector<1x1xf32>
    %cst_17 = arith.constant 0.000000e+00 : f32
    %30 = vector.broadcast %cst_17 : f32 to vector<8x1xf32>
    %31 = vector.broadcast %29 : vector<1x1xf32> to vector<8x1xf32>
    %32 = arith.addf %30, %31 : vector<8x1xf32>
    %cst_18 = arith.constant 0.000000e+00 : f32
    %33 = vector.broadcast %cst_18 : f32 to vector<8x2xf32>
    %34 = arith.cmpf oge, %16, %33 : vector<8x2xf32>
    %cst_19 = arith.constant 0.899999976 : f32
    %35 = vector.broadcast %cst_19 : f32 to vector<8x2xf32>
    %36 = arith.mulf %35, %16 : vector<8x2xf32>
    %37 = arith.select %34, %16, %36 : vector<8x2xi1>, vector<8x2xf32>
    %cst_20 = arith.constant 0.000000e+00 : f32
    %38 = vector.broadcast %cst_20 : f32 to vector<8x2xf32>
    %39 = arith.cmpf oge, %20, %38 : vector<8x2xf32>
    %cst_21 = arith.constant 0.899999976 : f32
    %40 = vector.broadcast %cst_21 : f32 to vector<8x2xf32>
    %41 = arith.mulf %40, %20 : vector<8x2xf32>
    %42 = arith.select %39, %20, %41 : vector<8x2xi1>, vector<8x2xf32>
    %c0_22 = arith.constant 0 : index
    %c0_23 = arith.constant 0 : index
    %c0_24 = arith.constant 0 : index
    %43 = vector.load %arg2[%c0_22, %c0_23, %c0_24] : memref<4x2x32xf32, #tpu.memory_space<vmem>>, vector<1x2x32xf32>
    %44 = vector.shape_cast %43 : vector<1x2x32xf32> to vector<2x32xf32>
    %cst_25 = arith.constant dense<0.000000e+00> : vector<8x32xf32>
    %45 = tpu.matmul %37, %44, %cst_25 {dimension_numbers = #tpu.dot_dimension_numbers<[1], [0], [0], [1], [0, 0, 1, 1], [], []>} : vector<8x2xf32>, vector<2x32xf32>, vector<8x32xf32> -> vector<8x32xf32>
    %c0_26 = arith.constant 0 : index
    %c0_27 = arith.constant 0 : index
    %c0_28 = arith.constant 0 : index
    %46 = vector.load %arg3[%c0_26, %c0_27, %c0_28] : memref<4x4x32xf32, #tpu.memory_space<vmem>>, vector<1x4x32xf32>
    %47 = vector.shape_cast %46 : vector<1x4x32xf32> to vector<4x32xf32>
    %cst_29 = arith.constant dense<0.000000e+00> : vector<8x32xf32>
    %48 = tpu.matmul %4, %47, %cst_29 {dimension_numbers = #tpu.dot_dimension_numbers<[1], [0], [0], [1], [0, 0, 1, 1], [], []>} : vector<8x4xf32>, vector<4x32xf32>, vector<8x32xf32> -> vector<8x32xf32>
    %49 = arith.addf %45, %48 : vector<8x32xf32>
    %c0_30 = arith.constant 0 : index
    %c0_31 = arith.constant 0 : index
    %c0_32 = arith.constant 0 : index
    %50 = vector.load %arg6[%c0_30, %c0_31, %c0_32] : memref<12x1x32xf32, #tpu.memory_space<vmem>>, vector<1x1x32xf32>
    %51 = vector.shape_cast %50 : vector<1x1x32xf32> to vector<1x32xf32>
    %52 = vector.broadcast %51 : vector<1x32xf32> to vector<8x32xf32>
    %53 = arith.addf %49, %52 : vector<8x32xf32>
    %cst_33 = arith.constant 0.000000e+00 : f32
    %54 = vector.broadcast %cst_33 : f32 to vector<8x32xf32>
    %55 = arith.cmpf ogt, %53, %54 : vector<8x32xf32>
    %cst_34 = arith.constant 0.00999999977 : f32
    %56 = vector.broadcast %cst_34 : f32 to vector<8x32xf32>
    %57 = arith.mulf %56, %53 : vector<8x32xf32>
    %58 = arith.select %55, %53, %57 : vector<8x32xi1>, vector<8x32xf32>
    %c0_35 = arith.constant 0 : index
    %c0_36 = arith.constant 0 : index
    %c0_37 = arith.constant 0 : index
    %59 = vector.load %arg4[%c0_35, %c0_36, %c0_37] : memref<8x32x32xf32, #tpu.memory_space<vmem>>, vector<1x32x32xf32>
    %60 = vector.shape_cast %59 : vector<1x32x32xf32> to vector<32x32xf32>
    %cst_38 = arith.constant dense<0.000000e+00> : vector<8x32xf32>
    %61 = tpu.matmul %58, %60, %cst_38 {dimension_numbers = #tpu.dot_dimension_numbers<[1], [0], [0], [1], [0, 0, 1, 1], [], []>} : vector<8x32xf32>, vector<32x32xf32>, vector<8x32xf32> -> vector<8x32xf32>
    %c1_39 = arith.constant 1 : index
    %c0_40 = arith.constant 0 : index
    %c0_41 = arith.constant 0 : index
    %62 = vector.load %arg6[%c1_39, %c0_40, %c0_41] : memref<12x1x32xf32, #tpu.memory_space<vmem>>, vector<1x1x32xf32>
    %63 = vector.shape_cast %62 : vector<1x1x32xf32> to vector<1x32xf32>
    %64 = vector.broadcast %63 : vector<1x32xf32> to vector<8x32xf32>
    %65 = arith.addf %61, %64 : vector<8x32xf32>
    %cst_42 = arith.constant 0.000000e+00 : f32
    %66 = vector.broadcast %cst_42 : f32 to vector<8x32xf32>
    %67 = arith.cmpf ogt, %65, %66 : vector<8x32xf32>
    %cst_43 = arith.constant 0.00999999977 : f32
    %68 = vector.broadcast %cst_43 : f32 to vector<8x32xf32>
    %69 = arith.mulf %68, %65 : vector<8x32xf32>
    %70 = arith.select %67, %65, %69 : vector<8x32xi1>, vector<8x32xf32>
    %c1_44 = arith.constant 1 : index
    %c0_45 = arith.constant 0 : index
    %c0_46 = arith.constant 0 : index
    %71 = vector.load %arg4[%c1_44, %c0_45, %c0_46] : memref<8x32x32xf32, #tpu.memory_space<vmem>>, vector<1x32x32xf32>
    %72 = vector.shape_cast %71 : vector<1x32x32xf32> to vector<32x32xf32>
    %cst_47 = arith.constant dense<0.000000e+00> : vector<8x32xf32>
    %73 = tpu.matmul %70, %72, %cst_47 {dimension_numbers = #tpu.dot_dimension_numbers<[1], [0], [0], [1], [0, 0, 1, 1], [], []>} : vector<8x32xf32>, vector<32x32xf32>, vector<8x32xf32> -> vector<8x32xf32>
    %c2_48 = arith.constant 2 : index
    %c0_49 = arith.constant 0 : index
    %c0_50 = arith.constant 0 : index
    %74 = vector.load %arg6[%c2_48, %c0_49, %c0_50] : memref<12x1x32xf32, #tpu.memory_space<vmem>>, vector<1x1x32xf32>
    %75 = vector.shape_cast %74 : vector<1x1x32xf32> to vector<1x32xf32>
    %76 = vector.broadcast %75 : vector<1x32xf32> to vector<8x32xf32>
    %77 = arith.addf %73, %76 : vector<8x32xf32>
    %cst_51 = arith.constant 0.000000e+00 : f32
    %78 = vector.broadcast %cst_51 : f32 to vector<8x32xf32>
    %79 = arith.cmpf ogt, %77, %78 : vector<8x32xf32>
    %cst_52 = arith.constant 0.00999999977 : f32
    %80 = vector.broadcast %cst_52 : f32 to vector<8x32xf32>
    %81 = arith.mulf %80, %77 : vector<8x32xf32>
    %82 = arith.select %79, %77, %81 : vector<8x32xi1>, vector<8x32xf32>
    %c0_53 = arith.constant 0 : index
    %c0_54 = arith.constant 0 : index
    %c0_55 = arith.constant 0 : index
    %83 = vector.load %arg5[%c0_53, %c0_54, %c0_55] : memref<4x32x2xf32, #tpu.memory_space<vmem>>, vector<1x32x2xf32>
    %84 = vector.shape_cast %83 : vector<1x32x2xf32> to vector<32x2xf32>
    %cst_56 = arith.constant dense<0.000000e+00> : vector<8x2xf32>
    %85 = tpu.matmul %82, %84, %cst_56 {dimension_numbers = #tpu.dot_dimension_numbers<[1], [0], [0], [1], [0, 0, 1, 1], [], []>} : vector<8x32xf32>, vector<32x2xf32>, vector<8x2xf32> -> vector<8x2xf32>
    %c0_57 = arith.constant 0 : index
    %c0_58 = arith.constant 0 : index
    %c0_59 = arith.constant 0 : index
    %86 = vector.load %arg7[%c0_57, %c0_58, %c0_59] : memref<4x1x2xf32, #tpu.memory_space<vmem>>, vector<1x1x2xf32>
    %87 = vector.shape_cast %86 : vector<1x1x2xf32> to vector<1x2xf32>
    %88 = vector.broadcast %87 : vector<1x2xf32> to vector<8x2xf32>
    %89 = arith.addf %85, %88 : vector<8x2xf32>
    %90 = math.tanh %89 : vector<8x2xf32>
    %c2_60 = arith.constant 2 : index
    %c0_61 = arith.constant 0 : index
    %c0_62 = arith.constant 0 : index
    %91 = vector.load %arg2[%c2_60, %c0_61, %c0_62] : memref<4x2x32xf32, #tpu.memory_space<vmem>>, vector<1x2x32xf32>
    %92 = vector.shape_cast %91 : vector<1x2x32xf32> to vector<2x32xf32>
    %cst_63 = arith.constant dense<0.000000e+00> : vector<8x32xf32>
    %93 = tpu.matmul %37, %92, %cst_63 {dimension_numbers = #tpu.dot_dimension_numbers<[1], [0], [0], [1], [0, 0, 1, 1], [], []>} : vector<8x2xf32>, vector<2x32xf32>, vector<8x32xf32> -> vector<8x32xf32>
    %c2_64 = arith.constant 2 : index
    %c0_65 = arith.constant 0 : index
    %c0_66 = arith.constant 0 : index
    %94 = vector.load %arg3[%c2_64, %c0_65, %c0_66] : memref<4x4x32xf32, #tpu.memory_space<vmem>>, vector<1x4x32xf32>
    %95 = vector.shape_cast %94 : vector<1x4x32xf32> to vector<4x32xf32>
    %cst_67 = arith.constant dense<0.000000e+00> : vector<8x32xf32>
    %96 = tpu.matmul %4, %95, %cst_67 {dimension_numbers = #tpu.dot_dimension_numbers<[1], [0], [0], [1], [0, 0, 1, 1], [], []>} : vector<8x4xf32>, vector<4x32xf32>, vector<8x32xf32> -> vector<8x32xf32>
    %97 = arith.addf %93, %96 : vector<8x32xf32>
    %c6 = arith.constant 6 : index
    %c0_68 = arith.constant 0 : index
    %c0_69 = arith.constant 0 : index
    %98 = vector.load %arg6[%c6, %c0_68, %c0_69] : memref<12x1x32xf32, #tpu.memory_space<vmem>>, vector<1x1x32xf32>
    %99 = vector.shape_cast %98 : vector<1x1x32xf32> to vector<1x32xf32>
    %100 = vector.broadcast %99 : vector<1x32xf32> to vector<8x32xf32>
    %101 = arith.addf %97, %100 : vector<8x32xf32>
    %cst_70 = arith.constant 0.000000e+00 : f32
    %102 = vector.broadcast %cst_70 : f32 to vector<8x32xf32>
    %103 = arith.cmpf ogt, %101, %102 : vector<8x32xf32>
    %cst_71 = arith.constant 0.00999999977 : f32
    %104 = vector.broadcast %cst_71 : f32 to vector<8x32xf32>
    %105 = arith.mulf %104, %101 : vector<8x32xf32>
    %106 = arith.select %103, %101, %105 : vector<8x32xi1>, vector<8x32xf32>
    %c4 = arith.constant 4 : index
    %c0_72 = arith.constant 0 : index
    %c0_73 = arith.constant 0 : index
    %107 = vector.load %arg4[%c4, %c0_72, %c0_73] : memref<8x32x32xf32, #tpu.memory_space<vmem>>, vector<1x32x32xf32>
    %108 = vector.shape_cast %107 : vector<1x32x32xf32> to vector<32x32xf32>
    %cst_74 = arith.constant dense<0.000000e+00> : vector<8x32xf32>
    %109 = tpu.matmul %106, %108, %cst_74 {dimension_numbers = #tpu.dot_dimension_numbers<[1], [0], [0], [1], [0, 0, 1, 1], [], []>} : vector<8x32xf32>, vector<32x32xf32>, vector<8x32xf32> -> vector<8x32xf32>
    %c7 = arith.constant 7 : index
    %c0_75 = arith.constant 0 : index
    %c0_76 = arith.constant 0 : index
    %110 = vector.load %arg6[%c7, %c0_75, %c0_76] : memref<12x1x32xf32, #tpu.memory_space<vmem>>, vector<1x1x32xf32>
    %111 = vector.shape_cast %110 : vector<1x1x32xf32> to vector<1x32xf32>
    %112 = vector.broadcast %111 : vector<1x32xf32> to vector<8x32xf32>
    %113 = arith.addf %109, %112 : vector<8x32xf32>
    %cst_77 = arith.constant 0.000000e+00 : f32
    %114 = vector.broadcast %cst_77 : f32 to vector<8x32xf32>
    %115 = arith.cmpf ogt, %113, %114 : vector<8x32xf32>
    %cst_78 = arith.constant 0.00999999977 : f32
    %116 = vector.broadcast %cst_78 : f32 to vector<8x32xf32>
    %117 = arith.mulf %116, %113 : vector<8x32xf32>
    %118 = arith.select %115, %113, %117 : vector<8x32xi1>, vector<8x32xf32>
    %c5 = arith.constant 5 : index
    %c0_79 = arith.constant 0 : index
    %c0_80 = arith.constant 0 : index
    %119 = vector.load %arg4[%c5, %c0_79, %c0_80] : memref<8x32x32xf32, #tpu.memory_space<vmem>>, vector<1x32x32xf32>
    %120 = vector.shape_cast %119 : vector<1x32x32xf32> to vector<32x32xf32>
    %cst_81 = arith.constant dense<0.000000e+00> : vector<8x32xf32>
    %121 = tpu.matmul %118, %120, %cst_81 {dimension_numbers = #tpu.dot_dimension_numbers<[1], [0], [0], [1], [0, 0, 1, 1], [], []>} : vector<8x32xf32>, vector<32x32xf32>, vector<8x32xf32> -> vector<8x32xf32>
    %c8 = arith.constant 8 : index
    %c0_82 = arith.constant 0 : index
    %c0_83 = arith.constant 0 : index
    %122 = vector.load %arg6[%c8, %c0_82, %c0_83] : memref<12x1x32xf32, #tpu.memory_space<vmem>>, vector<1x1x32xf32>
    %123 = vector.shape_cast %122 : vector<1x1x32xf32> to vector<1x32xf32>
    %124 = vector.broadcast %123 : vector<1x32xf32> to vector<8x32xf32>
    %125 = arith.addf %121, %124 : vector<8x32xf32>
    %cst_84 = arith.constant 0.000000e+00 : f32
    %126 = vector.broadcast %cst_84 : f32 to vector<8x32xf32>
    %127 = arith.cmpf ogt, %125, %126 : vector<8x32xf32>
    %cst_85 = arith.constant 0.00999999977 : f32
    %128 = vector.broadcast %cst_85 : f32 to vector<8x32xf32>
    %129 = arith.mulf %128, %125 : vector<8x32xf32>
    %130 = arith.select %127, %125, %129 : vector<8x32xi1>, vector<8x32xf32>
    %c2_86 = arith.constant 2 : index
    %c0_87 = arith.constant 0 : index
    %c0_88 = arith.constant 0 : index
    %131 = vector.load %arg5[%c2_86, %c0_87, %c0_88] : memref<4x32x2xf32, #tpu.memory_space<vmem>>, vector<1x32x2xf32>
    %132 = vector.shape_cast %131 : vector<1x32x2xf32> to vector<32x2xf32>
    %cst_89 = arith.constant dense<0.000000e+00> : vector<8x2xf32>
    %133 = tpu.matmul %130, %132, %cst_89 {dimension_numbers = #tpu.dot_dimension_numbers<[1], [0], [0], [1], [0, 0, 1, 1], [], []>} : vector<8x32xf32>, vector<32x2xf32>, vector<8x2xf32> -> vector<8x2xf32>
    %c2_90 = arith.constant 2 : index
    %c0_91 = arith.constant 0 : index
    %c0_92 = arith.constant 0 : index
    %134 = vector.load %arg7[%c2_90, %c0_91, %c0_92] : memref<4x1x2xf32, #tpu.memory_space<vmem>>, vector<1x1x2xf32>
    %135 = vector.shape_cast %134 : vector<1x1x2xf32> to vector<1x2xf32>
    %136 = vector.broadcast %135 : vector<1x2xf32> to vector<8x2xf32>
    %137 = arith.addf %133, %136 : vector<8x2xf32>
    %138 = math.exp %90 : vector<8x2xf32>
    %139 = arith.mulf %42, %138 : vector<8x2xf32>
    %140 = arith.addf %139, %137 : vector<8x2xf32>
    %cst_93 = arith.constant dense<0.000000e+00> : vector<8xf32>
    %141 = vector.multi_reduction <add>, %90, %cst_93 [1] : vector<8x2xf32> to vector<8xf32>
    %142 = vector.shape_cast %141 : vector<8xf32> to vector<8x1xf32>
    %143 = arith.addf %32, %142 : vector<8x1xf32>
    %c1_94 = arith.constant 1 : index
    %c0_95 = arith.constant 0 : index
    %c0_96 = arith.constant 0 : index
    %144 = vector.load %arg2[%c1_94, %c0_95, %c0_96] : memref<4x2x32xf32, #tpu.memory_space<vmem>>, vector<1x2x32xf32>
    %145 = vector.shape_cast %144 : vector<1x2x32xf32> to vector<2x32xf32>
    %cst_97 = arith.constant dense<0.000000e+00> : vector<8x32xf32>
    %146 = tpu.matmul %140, %145, %cst_97 {dimension_numbers = #tpu.dot_dimension_numbers<[1], [0], [0], [1], [0, 0, 1, 1], [], []>} : vector<8x2xf32>, vector<2x32xf32>, vector<8x32xf32> -> vector<8x32xf32>
    %c1_98 = arith.constant 1 : index
    %c0_99 = arith.constant 0 : index
    %c0_100 = arith.constant 0 : index
    %147 = vector.load %arg3[%c1_98, %c0_99, %c0_100] : memref<4x4x32xf32, #tpu.memory_space<vmem>>, vector<1x4x32xf32>
    %148 = vector.shape_cast %147 : vector<1x4x32xf32> to vector<4x32xf32>
    %cst_101 = arith.constant dense<0.000000e+00> : vector<8x32xf32>
    %149 = tpu.matmul %4, %148, %cst_101 {dimension_numbers = #tpu.dot_dimension_numbers<[1], [0], [0], [1], [0, 0, 1, 1], [], []>} : vector<8x4xf32>, vector<4x32xf32>, vector<8x32xf32> -> vector<8x32xf32>
    %150 = arith.addf %146, %149 : vector<8x32xf32>
    %c3_102 = arith.constant 3 : index
    %c0_103 = arith.constant 0 : index
    %c0_104 = arith.constant 0 : index
    %151 = vector.load %arg6[%c3_102, %c0_103, %c0_104] : memref<12x1x32xf32, #tpu.memory_space<vmem>>, vector<1x1x32xf32>
    %152 = vector.shape_cast %151 : vector<1x1x32xf32> to vector<1x32xf32>
    %153 = vector.broadcast %152 : vector<1x32xf32> to vector<8x32xf32>
    %154 = arith.addf %150, %153 : vector<8x32xf32>
    %cst_105 = arith.constant 0.000000e+00 : f32
    %155 = vector.broadcast %cst_105 : f32 to vector<8x32xf32>
    %156 = arith.cmpf ogt, %154, %155 : vector<8x32xf32>
    %cst_106 = arith.constant 0.00999999977 : f32
    %157 = vector.broadcast %cst_106 : f32 to vector<8x32xf32>
    %158 = arith.mulf %157, %154 : vector<8x32xf32>
    %159 = arith.select %156, %154, %158 : vector<8x32xi1>, vector<8x32xf32>
    %c2_107 = arith.constant 2 : index
    %c0_108 = arith.constant 0 : index
    %c0_109 = arith.constant 0 : index
    %160 = vector.load %arg4[%c2_107, %c0_108, %c0_109] : memref<8x32x32xf32, #tpu.memory_space<vmem>>, vector<1x32x32xf32>
    %161 = vector.shape_cast %160 : vector<1x32x32xf32> to vector<32x32xf32>
    %cst_110 = arith.constant dense<0.000000e+00> : vector<8x32xf32>
    %162 = tpu.matmul %159, %161, %cst_110 {dimension_numbers = #tpu.dot_dimension_numbers<[1], [0], [0], [1], [0, 0, 1, 1], [], []>} : vector<8x32xf32>, vector<32x32xf32>, vector<8x32xf32> -> vector<8x32xf32>
    %c4_111 = arith.constant 4 : index
    %c0_112 = arith.constant 0 : index
    %c0_113 = arith.constant 0 : index
    %163 = vector.load %arg6[%c4_111, %c0_112, %c0_113] : memref<12x1x32xf32, #tpu.memory_space<vmem>>, vector<1x1x32xf32>
    %164 = vector.shape_cast %163 : vector<1x1x32xf32> to vector<1x32xf32>
    %165 = vector.broadcast %164 : vector<1x32xf32> to vector<8x32xf32>
    %166 = arith.addf %162, %165 : vector<8x32xf32>
    %cst_114 = arith.constant 0.000000e+00 : f32
    %167 = vector.broadcast %cst_114 : f32 to vector<8x32xf32>
    %168 = arith.cmpf ogt, %166, %167 : vector<8x32xf32>
    %cst_115 = arith.constant 0.00999999977 : f32
    %169 = vector.broadcast %cst_115 : f32 to vector<8x32xf32>
    %170 = arith.mulf %169, %166 : vector<8x32xf32>
    %171 = arith.select %168, %166, %170 : vector<8x32xi1>, vector<8x32xf32>
    %c3_116 = arith.constant 3 : index
    %c0_117 = arith.constant 0 : index
    %c0_118 = arith.constant 0 : index
    %172 = vector.load %arg4[%c3_116, %c0_117, %c0_118] : memref<8x32x32xf32, #tpu.memory_space<vmem>>, vector<1x32x32xf32>
    %173 = vector.shape_cast %172 : vector<1x32x32xf32> to vector<32x32xf32>
    %cst_119 = arith.constant dense<0.000000e+00> : vector<8x32xf32>
    %174 = tpu.matmul %171, %173, %cst_119 {dimension_numbers = #tpu.dot_dimension_numbers<[1], [0], [0], [1], [0, 0, 1, 1], [], []>} : vector<8x32xf32>, vector<32x32xf32>, vector<8x32xf32> -> vector<8x32xf32>
    %c5_120 = arith.constant 5 : index
    %c0_121 = arith.constant 0 : index
    %c0_122 = arith.constant 0 : index
    %175 = vector.load %arg6[%c5_120, %c0_121, %c0_122] : memref<12x1x32xf32, #tpu.memory_space<vmem>>, vector<1x1x32xf32>
    %176 = vector.shape_cast %175 : vector<1x1x32xf32> to vector<1x32xf32>
    %177 = vector.broadcast %176 : vector<1x32xf32> to vector<8x32xf32>
    %178 = arith.addf %174, %177 : vector<8x32xf32>
    %cst_123 = arith.constant 0.000000e+00 : f32
    %179 = vector.broadcast %cst_123 : f32 to vector<8x32xf32>
    %180 = arith.cmpf ogt, %178, %179 : vector<8x32xf32>
    %cst_124 = arith.constant 0.00999999977 : f32
    %181 = vector.broadcast %cst_124 : f32 to vector<8x32xf32>
    %182 = arith.mulf %181, %178 : vector<8x32xf32>
    %183 = arith.select %180, %178, %182 : vector<8x32xi1>, vector<8x32xf32>
    %c1_125 = arith.constant 1 : index
    %c0_126 = arith.constant 0 : index
    %c0_127 = arith.constant 0 : index
    %184 = vector.load %arg5[%c1_125, %c0_126, %c0_127] : memref<4x32x2xf32, #tpu.memory_space<vmem>>, vector<1x32x2xf32>
    %185 = vector.shape_cast %184 : vector<1x32x2xf32> to vector<32x2xf32>
    %cst_128 = arith.constant dense<0.000000e+00> : vector<8x2xf32>
    %186 = tpu.matmul %183, %185, %cst_128 {dimension_numbers = #tpu.dot_dimension_numbers<[1], [0], [0], [1], [0, 0, 1, 1], [], []>} : vector<8x32xf32>, vector<32x2xf32>, vector<8x2xf32> -> vector<8x2xf32>
    %c1_129 = arith.constant 1 : index
    %c0_130 = arith.constant 0 : index
    %c0_131 = arith.constant 0 : index
    %187 = vector.load %arg7[%c1_129, %c0_130, %c0_131] : memref<4x1x2xf32, #tpu.memory_space<vmem>>, vector<1x1x2xf32>
    %188 = vector.shape_cast %187 : vector<1x1x2xf32> to vector<1x2xf32>
    %189 = vector.broadcast %188 : vector<1x2xf32> to vector<8x2xf32>
    %190 = arith.addf %186, %189 : vector<8x2xf32>
    %191 = math.tanh %190 : vector<8x2xf32>
    %c3_132 = arith.constant 3 : index
    %c0_133 = arith.constant 0 : index
    %c0_134 = arith.constant 0 : index
    %192 = vector.load %arg2[%c3_132, %c0_133, %c0_134] : memref<4x2x32xf32, #tpu.memory_space<vmem>>, vector<1x2x32xf32>
    %193 = vector.shape_cast %192 : vector<1x2x32xf32> to vector<2x32xf32>
    %cst_135 = arith.constant dense<0.000000e+00> : vector<8x32xf32>
    %194 = tpu.matmul %140, %193, %cst_135 {dimension_numbers = #tpu.dot_dimension_numbers<[1], [0], [0], [1], [0, 0, 1, 1], [], []>} : vector<8x2xf32>, vector<2x32xf32>, vector<8x32xf32> -> vector<8x32xf32>
    %c3_136 = arith.constant 3 : index
    %c0_137 = arith.constant 0 : index
    %c0_138 = arith.constant 0 : index
    %195 = vector.load %arg3[%c3_136, %c0_137, %c0_138] : memref<4x4x32xf32, #tpu.memory_space<vmem>>, vector<1x4x32xf32>
    %196 = vector.shape_cast %195 : vector<1x4x32xf32> to vector<4x32xf32>
    %cst_139 = arith.constant dense<0.000000e+00> : vector<8x32xf32>
    %197 = tpu.matmul %4, %196, %cst_139 {dimension_numbers = #tpu.dot_dimension_numbers<[1], [0], [0], [1], [0, 0, 1, 1], [], []>} : vector<8x4xf32>, vector<4x32xf32>, vector<8x32xf32> -> vector<8x32xf32>
    %198 = arith.addf %194, %197 : vector<8x32xf32>
    %c9 = arith.constant 9 : index
    %c0_140 = arith.constant 0 : index
    %c0_141 = arith.constant 0 : index
    %199 = vector.load %arg6[%c9, %c0_140, %c0_141] : memref<12x1x32xf32, #tpu.memory_space<vmem>>, vector<1x1x32xf32>
    %200 = vector.shape_cast %199 : vector<1x1x32xf32> to vector<1x32xf32>
    %201 = vector.broadcast %200 : vector<1x32xf32> to vector<8x32xf32>
    %202 = arith.addf %198, %201 : vector<8x32xf32>
    %cst_142 = arith.constant 0.000000e+00 : f32
    %203 = vector.broadcast %cst_142 : f32 to vector<8x32xf32>
    %204 = arith.cmpf ogt, %202, %203 : vector<8x32xf32>
    %cst_143 = arith.constant 0.00999999977 : f32
    %205 = vector.broadcast %cst_143 : f32 to vector<8x32xf32>
    %206 = arith.mulf %205, %202 : vector<8x32xf32>
    %207 = arith.select %204, %202, %206 : vector<8x32xi1>, vector<8x32xf32>
    %c6_144 = arith.constant 6 : index
    %c0_145 = arith.constant 0 : index
    %c0_146 = arith.constant 0 : index
    %208 = vector.load %arg4[%c6_144, %c0_145, %c0_146] : memref<8x32x32xf32, #tpu.memory_space<vmem>>, vector<1x32x32xf32>
    %209 = vector.shape_cast %208 : vector<1x32x32xf32> to vector<32x32xf32>
    %cst_147 = arith.constant dense<0.000000e+00> : vector<8x32xf32>
    %210 = tpu.matmul %207, %209, %cst_147 {dimension_numbers = #tpu.dot_dimension_numbers<[1], [0], [0], [1], [0, 0, 1, 1], [], []>} : vector<8x32xf32>, vector<32x32xf32>, vector<8x32xf32> -> vector<8x32xf32>
    %c10 = arith.constant 10 : index
    %c0_148 = arith.constant 0 : index
    %c0_149 = arith.constant 0 : index
    %211 = vector.load %arg6[%c10, %c0_148, %c0_149] : memref<12x1x32xf32, #tpu.memory_space<vmem>>, vector<1x1x32xf32>
    %212 = vector.shape_cast %211 : vector<1x1x32xf32> to vector<1x32xf32>
    %213 = vector.broadcast %212 : vector<1x32xf32> to vector<8x32xf32>
    %214 = arith.addf %210, %213 : vector<8x32xf32>
    %cst_150 = arith.constant 0.000000e+00 : f32
    %215 = vector.broadcast %cst_150 : f32 to vector<8x32xf32>
    %216 = arith.cmpf ogt, %214, %215 : vector<8x32xf32>
    %cst_151 = arith.constant 0.00999999977 : f32
    %217 = vector.broadcast %cst_151 : f32 to vector<8x32xf32>
    %218 = arith.mulf %217, %214 : vector<8x32xf32>
    %219 = arith.select %216, %214, %218 : vector<8x32xi1>, vector<8x32xf32>
    %c7_152 = arith.constant 7 : index
    %c0_153 = arith.constant 0 : index
    %c0_154 = arith.constant 0 : index
    %220 = vector.load %arg4[%c7_152, %c0_153, %c0_154] : memref<8x32x32xf32, #tpu.memory_space<vmem>>, vector<1x32x32xf32>
    %221 = vector.shape_cast %220 : vector<1x32x32xf32> to vector<32x32xf32>
    %cst_155 = arith.constant dense<0.000000e+00> : vector<8x32xf32>
    %222 = tpu.matmul %219, %221, %cst_155 {dimension_numbers = #tpu.dot_dimension_numbers<[1], [0], [0], [1], [0, 0, 1, 1], [], []>} : vector<8x32xf32>, vector<32x32xf32>, vector<8x32xf32> -> vector<8x32xf32>
    %c11 = arith.constant 11 : index
    %c0_156 = arith.constant 0 : index
    %c0_157 = arith.constant 0 : index
    %223 = vector.load %arg6[%c11, %c0_156, %c0_157] : memref<12x1x32xf32, #tpu.memory_space<vmem>>, vector<1x1x32xf32>
    %224 = vector.shape_cast %223 : vector<1x1x32xf32> to vector<1x32xf32>
    %225 = vector.broadcast %224 : vector<1x32xf32> to vector<8x32xf32>
    %226 = arith.addf %222, %225 : vector<8x32xf32>
    %cst_158 = arith.constant 0.000000e+00 : f32
    %227 = vector.broadcast %cst_158 : f32 to vector<8x32xf32>
    %228 = arith.cmpf ogt, %226, %227 : vector<8x32xf32>
    %cst_159 = arith.constant 0.00999999977 : f32
    %229 = vector.broadcast %cst_159 : f32 to vector<8x32xf32>
    %230 = arith.mulf %229, %226 : vector<8x32xf32>
    %231 = arith.select %228, %226, %230 : vector<8x32xi1>, vector<8x32xf32>
    %c3_160 = arith.constant 3 : index
    %c0_161 = arith.constant 0 : index
    %c0_162 = arith.constant 0 : index
    %232 = vector.load %arg5[%c3_160, %c0_161, %c0_162] : memref<4x32x2xf32, #tpu.memory_space<vmem>>, vector<1x32x2xf32>
    %233 = vector.shape_cast %232 : vector<1x32x2xf32> to vector<32x2xf32>
    %cst_163 = arith.constant dense<0.000000e+00> : vector<8x2xf32>
    %234 = tpu.matmul %231, %233, %cst_163 {dimension_numbers = #tpu.dot_dimension_numbers<[1], [0], [0], [1], [0, 0, 1, 1], [], []>} : vector<8x32xf32>, vector<32x2xf32>, vector<8x2xf32> -> vector<8x2xf32>
    %c3_164 = arith.constant 3 : index
    %c0_165 = arith.constant 0 : index
    %c0_166 = arith.constant 0 : index
    %235 = vector.load %arg7[%c3_164, %c0_165, %c0_166] : memref<4x1x2xf32, #tpu.memory_space<vmem>>, vector<1x1x2xf32>
    %236 = vector.shape_cast %235 : vector<1x1x2xf32> to vector<1x2xf32>
    %237 = vector.broadcast %236 : vector<1x2xf32> to vector<8x2xf32>
    %238 = arith.addf %234, %237 : vector<8x2xf32>
    %239 = math.exp %191 : vector<8x2xf32>
    %240 = arith.mulf %37, %239 : vector<8x2xf32>
    %241 = arith.addf %240, %238 : vector<8x2xf32>
    %cst_167 = arith.constant dense<0.000000e+00> : vector<8xf32>
    %242 = vector.multi_reduction <add>, %191, %cst_167 [1] : vector<8x2xf32> to vector<8xf32>
    %243 = vector.shape_cast %242 : vector<8xf32> to vector<8x1xf32>
    %244 = arith.addf %143, %243 : vector<8x1xf32>
    %c0_168 = arith.constant 0 : index
    %c0_169 = arith.constant 0 : index
    %c0_170 = arith.constant 0 : index
    %245 = vector.load %arg9[%c0_168, %c0_169, %c0_170] : memref<2x2x4xf32, #tpu.memory_space<vmem>>, vector<1x2x4xf32>
    %246 = vector.shape_cast %245 : vector<1x2x4xf32> to vector<2x4xf32>
    %cst_171 = arith.constant dense<0.000000e+00> : vector<8x4xf32>
    %247 = tpu.matmul %140, %246, %cst_171 {dimension_numbers = #tpu.dot_dimension_numbers<[1], [0], [0], [1], [0, 0, 1, 1], [], []>} : vector<8x2xf32>, vector<2x4xf32>, vector<8x4xf32> -> vector<8x4xf32>
    %c1_172 = arith.constant 1 : index
    %c0_173 = arith.constant 0 : index
    %c0_174 = arith.constant 0 : index
    %248 = vector.load %arg9[%c1_172, %c0_173, %c0_174] : memref<2x2x4xf32, #tpu.memory_space<vmem>>, vector<1x2x4xf32>
    %249 = vector.shape_cast %248 : vector<1x2x4xf32> to vector<2x4xf32>
    %cst_175 = arith.constant dense<0.000000e+00> : vector<8x4xf32>
    %250 = tpu.matmul %241, %249, %cst_175 {dimension_numbers = #tpu.dot_dimension_numbers<[1], [0], [0], [1], [0, 0, 1, 1], [], []>} : vector<8x2xf32>, vector<2x4xf32>, vector<8x4xf32> -> vector<8x4xf32>
    %251 = arith.addf %247, %250 : vector<8x4xf32>
    %c0_176 = arith.constant 0 : index
    %c0_177 = arith.constant 0 : index
    %252 = vector.load %arg10[%c0_176, %c0_177] : memref<8x5xf32, #tpu.memory_space<vmem>>, vector<8x4xf32>
    tpu.vector_store %arg10[%c0_176, %c0_177], %251 {strides = array<i32>} : memref<8x5xf32, #tpu.memory_space<vmem>>, vector<8x4xf32>,
    %c0_178 = arith.constant 0 : index
    %c4_179 = arith.constant 4 : index
    %253 = vector.load %arg10[%c0_178, %c4_179] : memref<8x5xf32, #tpu.memory_space<vmem>>, vector<8x1xf32>
    tpu.vector_store %arg10[%c0_178, %c4_179], %244 {strides = array<i32>} : memref<8x5xf32, #tpu.memory_space<vmem>>, vector<8x1xf32>,
    return
  }
}

</mosaic_0001>

<llo_original>
// kernel: tpu_custom_call.1
$region0: #{tpu_custom_call.1}
  #allocation0 [shape = 'u32[]', space=smem, size = 0x4, offset = 0x4, fixed_abs, tag = 'smem constant byte address 0x4 - core index']
  #allocation1 [shape = 'u32[72,128]{1,0:T(1,128)}', space=vmem, size = 0x9000, scoped, tag = 'internal scratch']
  %s0 = inlined_call_operand.vmem [shape: f32[2,8,2], index: 0, kind: input, shape index: {}]
  %s1 = inlined_call_operand.vmem [shape: f32[8,4], index: 1, kind: input, shape index: {}]
  %s2 = inlined_call_operand.vmem [shape: f32[4,2,32], index: 2, kind: input, shape index: {}]
  %s3 = inlined_call_operand.vmem [shape: f32[4,4,32], index: 3, kind: input, shape index: {}]
  %s4 = inlined_call_operand.hbm [shape: f32[8,32,32], index: 4, kind: input, shape index: {}]
  %s5 = inlined_call_operand.vmem [shape: f32[4,32,2], index: 5, kind: input, shape index: {}]
  %s6 = inlined_call_operand.vmem [shape: f32[12,1,32], index: 6, kind: input, shape index: {}]
  %s7 = inlined_call_operand.vmem [shape: f32[4,1,2], index: 7, kind: input, shape index: {}]
  %s8 = inlined_call_operand.vmem [shape: f32[4,1,2], index: 8, kind: input, shape index: {}]
  %s9 = inlined_call_operand.vmem [shape: f32[2,2,4], index: 9, kind: input, shape index: {}]
  %s10 = inlined_call_operand.hbm [shape: f32[8,5], index: 10, kind: output, shape index: {}]
  %s11 = sld [smem:[#allocation0]]
  $region54: #{tpu_custom_call.1} parent=0
    _
  %s13 = ssub.s32 1, %s11
  %s14 = scalar_select 0, %s13, %s11
  $region1: #{tpu_custom_call.1} parent=0
    #allocation2 [shape = 'u8[131072]{0}', space=vmem, size = 0x20000, scoped, tag = 'input window, operand 4, single buffered']
    #allocation3 [shape = 's32[1]{0}', space=sflag, size = 0x4, scoped, tag = 'scoped memory for tpu_custom_call.1']
    #allocation4 [shape = 's32[1]{0}', space=sflag, size = 0x4, scoped, tag = 'scoped memory for tpu_custom_call.1']
    #allocation5 [shape = 'u8[4096]{0}', space=vmem, size = 0x1000, scoped, tag = 'output window, operand 0, single buffered']
    %15 = vsyncpa [#allocation3], 0
    %16 = vsyncpa [#allocation4], 0
    // Predicated region
    $region2: #{tpu_custom_call.1} parent=1 // pred_check
      _
    $region3: #{tpu_custom_call.1} parent=1 // pred_check_branch
      %18 = sbr.rel (0) target = $region5
    $region4: #{tpu_custom_call.1} parent=1 // pred_region
      _
    $region5: #{tpu_custom_call.1} parent=1 // pred_fallthru
      _
    // Predicated region
    $region6: #{tpu_custom_call.1} parent=1 // pred_check
      _
    $region7: #{tpu_custom_call.1} parent=1 // pred_check_branch
      %20 = sbr.rel (0) target = $region9
    $region8: #{tpu_custom_call.1} parent=1 // pred_region
      _
    $region9: #{tpu_custom_call.1} parent=1 // pred_fallthru
      _
    // Predicated region
    $region10: #{tpu_custom_call.1} parent=1 // pred_check
      _
    $region11: #{tpu_custom_call.1} parent=1 // pred_check_branch
      %22 = sbr.rel (0) target = $region13
    $region12: #{tpu_custom_call.1} parent=1 // pred_region
      _
    $region13: #{tpu_custom_call.1} parent=1 // pred_fallthru
      _
    // Predicated region
    $region14: #{tpu_custom_call.1} parent=1 // pred_check
      _
    $region15: #{tpu_custom_call.1} parent=1 // pred_check_branch
      %24 = sbr.rel (0) target = $region17
    $region16: #{tpu_custom_call.1} parent=1 // pred_region
      _
    $region17: #{tpu_custom_call.1} parent=1 // pred_fallthru
      _
    // Predicated region
    $region18: #{tpu_custom_call.1} parent=1 // pred_check
      _
    $region19: #{tpu_custom_call.1} parent=1 // pred_check_branch
      %26 = sbr.rel (0) target = $region21
    $region20: #{tpu_custom_call.1} parent=1 // pred_region
      %28 = vsyncadd [#allocation3], 0
      %s29 = sshll.u32 %s4, 4
      %s30 = int_to_ptr.hbm [resolvable:$true] %s29
      %s31 = sshll.u32 [#allocation2], 4
      %s32 = int_to_ptr.vmem [resolvable:$true] %s31
      %37 = dma.hbm_to_vmem [thread:$0]  %s30, 4096, %s32, [#allocation3], 128, 128, 8
    $region21: #{tpu_custom_call.1} parent=1 // pred_fallthru
      _
    // Predicated region
    $region22: #{tpu_custom_call.1} parent=1 // pred_check
      _
    $region23: #{tpu_custom_call.1} parent=1 // pred_check_branch
      %39 = sbr.rel (0) target = $region25
    $region24: #{tpu_custom_call.1} parent=1 // pred_region
      _
    $region25: #{tpu_custom_call.1} parent=1 // pred_fallthru
      _
    // Predicated region
    $region26: #{tpu_custom_call.1} parent=1 // pred_check
      _
    $region27: #{tpu_custom_call.1} parent=1 // pred_check_branch
      %41 = sbr.rel (0) target = $region29
    $region28: #{tpu_custom_call.1} parent=1 // pred_region
      _
    $region29: #{tpu_custom_call.1} parent=1 // pred_fallthru
      _
    // Predicated region
    $region30: #{tpu_custom_call.1} parent=1 // pred_check
      _
    $region31: #{tpu_custom_call.1} parent=1 // pred_check_branch
      %43 = sbr.rel (0) target = $region33
    $region32: #{tpu_custom_call.1} parent=1 // pred_region
      _
    $region33: #{tpu_custom_call.1} parent=1 // pred_fallthru
      _
    // Predicated region
    $region34: #{tpu_custom_call.1} parent=1 // pred_check
      _
    $region35: #{tpu_custom_call.1} parent=1 // pred_check_branch
      %45 = sbr.rel (0) target = $region37
    $region36: #{tpu_custom_call.1} parent=1 // pred_region
      _
    $region37: #{tpu_custom_call.1} parent=1 // pred_fallthru
      _
    // Predicated region
    $region38: #{tpu_custom_call.1} parent=1 // pred_check
      _
    $region39: #{tpu_custom_call.1} parent=1 // pred_check_branch
      %47 = sbr.rel (0) target = $region41
    $region40: #{tpu_custom_call.1} parent=1 // pred_region
      _
    $region41: #{tpu_custom_call.1} parent=1 // pred_fallthru
      _
    // Predicated region
    $region42: #{tpu_custom_call.1} parent=1 // pred_check
      _
    $region43: #{tpu_custom_call.1} parent=1 // pred_check_branch
      %49 = sbr.rel (0) target = $region45
    $region44: #{tpu_custom_call.1} parent=1 // pred_region
      %51 = dma.done [#allocation3], 4096
    $region45: #{tpu_custom_call.1} parent=1 // pred_fallthru
      _
    %v52 = vld [vmem:[%s0] sm:$0xff]
    %s53 = scalar_lea.vmem %s0, 8
    %v54 = vld [vmem:[%s53] sm:$0xff]
    %v55 = vld [vmem:[%s1] sm:$0xff]
    %v56 = vld [vmem:[%s8] sm:$0x1]
    %s57 = scalar_lea.vmem %s8, 1
    %v58 = vld [vmem:[%s57] sm:$0x1]
    %s59 = scalar_lea.vmem %s8, 2
    %v60 = vld [vmem:[%s59] sm:$0x1]
    %s61 = scalar_lea.vmem %s8, 3
    %v62 = vld [vmem:[%s61] sm:$0x1]
    %v64 = vperm.slane %v56, 0
    %v66 = vadd.f32 %v52, %v64
    %v68 = vperm.slane %v58, 0
    %v70 = vmul.f32 %v68, %v66
    %v72 = vperm.slane %v60, 0
    %v74 = vadd.f32 %v54, %v72
    %v76 = vperm.slane %v62, 0
    %v78 = vmul.f32 %v76, %v74
    %v79 = vand.u32 2147483647, %v58
    %v80 = vlog2.pop %v79
    %v81 = vmul.f32 %v80, 0.6931472
    %vm82 = vcmask 8192
    %v83 = vsel %vm82, %v81, 0.0
    %84 = vadd.xlane.f32.xlu0 %v83
    %v85 = vpop.xlane.xlu0 %84
    %v86 = vand.u32 2147483647, %v62
    %v87 = vlog2.pop %v86
    %v88 = vmul.f32 %v87, 0.6931472
    %v89 = vsel %vm82, %v88, 0.0
    %90 = vadd.xlane.f32.xlu0 %v89
    %v91 = vpop.xlane.xlu0 %90
    %v92 = vadd.f32 %v85, %v91
    %v93 = vperm.slane %v92, 0
    %v94 = vadd.f32 %v93, 0.0
    %vm95 = vcmp.ge.f32.partialorder %v70, 0.0
    %v96 = vmul.f32 %v70, 0.9
    %v97 = vsel %vm95, %v70, %v96
    %vm98 = vcmp.ge.f32.partialorder %v78, 0.0
    %v99 = vmul.f32 %v78, 0.9
    %v100 = vsel %vm98, %v78, %v99
    %v101 = vld [vmem:[%s2] sm:$0x3]
    %v102 = vld [vmem:[%s3] sm:$0xf]
    %vm103 = vcmask 31744
    %v105 = vsel %vm103, %v55, 0
    %vm107 = vcmask 1043456
    %v109 = vsel %vm107, %v102, 0
    %111 = vmatpush.msra.mxu0 0.0
    %112 = vmatpush.msra.mxu0 0.0
    %113 = vmatpush.msra.mxu0 0.0
    %114 = vmatpush.msra.mxu0 0.0
    %115 = vmatpush.msra.mxu0 0.0
    %116 = vmatpush.msra.mxu0 0.0
    %117 = vmatpush.msra.mxu0 0.0
    %118 = vmatpush.msra.mxu0 0.0
    %119 = vmatpush.msra.mxu0 0.0
    %120 = vmatpush.msra.mxu0 0.0
    %121 = vmatpush.msra.mxu0 0.0
    %122 = vmatpush.msra.mxu0 0.0
    %123 = vmatpush.msra.mxu0 0.0
    %124 = vmatpush.msra.mxu0 0.0
    %125 = vmatpush.msra.mxu0 0.0
    %126 = vmatpush.msra.mxu0 %v109
    %127 = vmatmul.f32.gmra.mxu0 %v105
    %v128 = vpop.f32.mrf.mxu0
    %v129 = vadd.f32 0.0, %v128
    %130 = vdwg.mxu0
    %vm131 = vcmask 15360
    %v133 = vsel %vm131, %v97, 0
    %vm135 = vcmask 1041408
    %v137 = vsel %vm135, %v101, 0
    %139 = vmatpush.msra.mxu0 0.0
    %140 = vmatpush.msra.mxu0 0.0
    %141 = vmatpush.msra.mxu0 0.0
    %142 = vmatpush.msra.mxu0 0.0
    %143 = vmatpush.msra.mxu0 0.0
    %144 = vmatpush.msra.mxu0 0.0
    %145 = vmatpush.msra.mxu0 0.0
    %146 = vmatpush.msra.mxu0 0.0
    %147 = vmatpush.msra.mxu0 0.0
    %148 = vmatpush.msra.mxu0 0.0
    %149 = vmatpush.msra.mxu0 0.0
    %150 = vmatpush.msra.mxu0 0.0
    %151 = vmatpush.msra.mxu0 0.0
    %152 = vmatpush.msra.mxu0 0.0
    %153 = vmatpush.msra.mxu0 0.0
    %154 = vmatpush.msra.mxu0 %v137
    %155 = vmatmul.f32.gmra.mxu0 %v133
    %v156 = vpop.f32.mrf.mxu0
    %v157 = vadd.f32 %v129, %v156
    %158 = vdwg.mxu0
    %v159 = vld [vmem:[%s6] sm:$0x1]
    %v161 = vperm.slane %v159, 0
    %v163 = vadd.f32 %v157, %v161
    %vm164 = vcmp.gt.f32.partialorder %v163, 0.0
    %v165 = vmul.f32 %v163, 0.01
    %v166 = vsel %vm164, %v163, %v165
    %v167 = vld [vmem:[#allocation2] sm:$0xff]
    %v168 = vld [vmem:[#allocation2 + $0x8] sm:$0xff]
    %v169 = vld [vmem:[#allocation2 + $0x10] sm:$0xff]
    %v170 = vld [vmem:[#allocation2 + $0x18] sm:$0xff]
    %s171 = scalar_lea.vmem %s6, 1
    %v172 = vld [vmem:[%s171] sm:$0x1]
    %v174 = vperm.slane %v172, 0
    %vm176 = vcmask 261120
    %v178 = vsel %vm176, %v166, 0
    %180 = vmatpush.msra.mxu0 0.0
    %181 = vmatpush.msra.mxu0 0.0
    %182 = vmatpush.msra.mxu0 0.0
    %183 = vmatpush.msra.mxu0 0.0
    %184 = vmatpush.msra.mxu0 0.0
    %185 = vmatpush.msra.mxu0 0.0
    %186 = vmatpush.msra.mxu0 0.0
    %187 = vmatpush.msra.mxu0 0.0
    %188 = vmatpush.msra.mxu0 0.0
    %189 = vmatpush.msra.mxu0 0.0
    %190 = vmatpush.msra.mxu0 0.0
    %191 = vmatpush.msra.mxu0 0.0
    %192 = vmatpush.msra.mxu0 %v170
    %193 = vmatpush.msra.mxu0 %v169
    %194 = vmatpush.msra.mxu0 %v168
    %195 = vmatpush.msra.mxu0 %v167
    %196 = vmatmul.f32.gmra.mxu0 %v178
    %v197 = vpop.f32.mrf.mxu0
    %v198 = vadd.f32 %v174, %v197
    %199 = vdwg.mxu0
    %vm200 = vcmp.gt.f32.partialorder %v198, 0.0
    %v201 = vmul.f32 %v198, 0.01
    %v202 = vsel %vm200, %v198, %v201
    %s203 = scalar_lea.vmem [#allocation2], 32
    %v204 = vld [vmem:[%s203] sm:$0xff]
    %v205 = vld [vmem:[%s203 + $0x8] sm:$0xff]
    %v206 = vld [vmem:[%s203 + $0x10] sm:$0xff]
    %v207 = vld [vmem:[%s203 + $0x18] sm:$0xff]
    %s208 = scalar_lea.vmem %s6, 2
    %v209 = vld [vmem:[%s208] sm:$0x1]
    %v211 = vperm.slane %v209, 0
    %v214 = vsel %vm176, %v202, 0
    %216 = vmatpush.msra.mxu0 0.0
    %217 = vmatpush.msra.mxu0 0.0
    %218 = vmatpush.msra.mxu0 0.0
    %219 = vmatpush.msra.mxu0 0.0
    %220 = vmatpush.msra.mxu0 0.0
    %221 = vmatpush.msra.mxu0 0.0
    %222 = vmatpush.msra.mxu0 0.0
    %223 = vmatpush.msra.mxu0 0.0
    %224 = vmatpush.msra.mxu0 0.0
    %225 = vmatpush.msra.mxu0 0.0
    %226 = vmatpush.msra.mxu0 0.0
    %227 = vmatpush.msra.mxu0 0.0
    %228 = vmatpush.msra.mxu0 %v207
    %229 = vmatpush.msra.mxu0 %v206
    %230 = vmatpush.msra.mxu0 %v205
    %231 = vmatpush.msra.mxu0 %v204
    %232 = vmatmul.f32.gmra.mxu0 %v214
    %v233 = vpop.f32.mrf.mxu0
    %v234 = vadd.f32 %v211, %v233
    %235 = vdwg.mxu0
    %vm236 = vcmp.gt.f32.partialorder %v234, 0.0
    %v237 = vmul.f32 %v234, 0.01
    %v238 = vsel %vm236, %v234, %v237
    %v239 = vld [vmem:[%s5] sm:$0xff]
    %v240 = vld [vmem:[%s5 + $0x8] sm:$0xff]
    %v241 = vld [vmem:[%s5 + $0x10] sm:$0xff]
    %v242 = vld [vmem:[%s5 + $0x18] sm:$0xff]
    %v243 = vld [vmem:[%s7] sm:$0x1]
    %v245 = vperm.slane %v243, 0
    %v248 = vsel %vm176, %v238, 0
    %250 = vmatpush.msra.mxu0 0.0
    %251 = vmatpush.msra.mxu0 0.0
    %252 = vmatpush.msra.mxu0 0.0
    %253 = vmatpush.msra.mxu0 0.0
    %254 = vmatpush.msra.mxu0 0.0
    %255 = vmatpush.msra.mxu0 0.0
    %256 = vmatpush.msra.mxu0 0.0
    %257 = vmatpush.msra.mxu0 0.0
    %258 = vmatpush.msra.mxu0 0.0
    %259 = vmatpush.msra.mxu0 0.0
    %260 = vmatpush.msra.mxu0 0.0
    %261 = vmatpush.msra.mxu0 0.0
    %262 = vmatpush.msra.mxu0 %v242
    %263 = vmatpush.msra.mxu0 %v241
    %264 = vmatpush.msra.mxu0 %v240
    %265 = vmatpush.msra.mxu0 %v239
    %266 = vmatmul.f32.gmra.mxu0 %v248
    %v267 = vpop.f32.mrf.mxu0
    %v268 = vadd.f32 %v245, %v267
    %269 = vdwg.mxu0
    %v270 = vtanh.pop %v268
    %s271 = scalar_lea.vmem %s2, 4
    %v272 = vld [vmem:[%s271] sm:$0x3]
    %s273 = scalar_lea.vmem %s3, 8
    %v274 = vld [vmem:[%s273] sm:$0xf]
    %v276 = vsel %vm107, %v274, 0
    %278 = vmatpush.msra.mxu0 0.0
    %279 = vmatpush.msra.mxu0 0.0
    %280 = vmatpush.msra.mxu0 0.0
    %281 = vmatpush.msra.mxu0 0.0
    %282 = vmatpush.msra.mxu0 0.0
    %283 = vmatpush.msra.mxu0 0.0
    %284 = vmatpush.msra.mxu0 0.0
    %285 = vmatpush.msra.mxu0 0.0
    %286 = vmatpush.msra.mxu0 0.0
    %287 = vmatpush.msra.mxu0 0.0
    %288 = vmatpush.msra.mxu0 0.0
    %289 = vmatpush.msra.mxu0 0.0
    %290 = vmatpush.msra.mxu0 0.0
    %291 = vmatpush.msra.mxu0 0.0
    %292 = vmatpush.msra.mxu0 0.0
    %293 = vmatpush.msra.mxu0 %v276
    %294 = vmatmul.f32.gmra.mxu0 %v105
    %v295 = vpop.f32.mrf.mxu0
    %v296 = vadd.f32 0.0, %v295
    %297 = vdwg.mxu0
    %v299 = vsel %vm135, %v272, 0
    %301 = vmatpush.msra.mxu0 0.0
    %302 = vmatpush.msra.mxu0 0.0
    %303 = vmatpush.msra.mxu0 0.0
    %304 = vmatpush.msra.mxu0 0.0
    %305 = vmatpush.msra.mxu0 0.0
    %306 = vmatpush.msra.mxu0 0.0
    %307 = vmatpush.msra.mxu0 0.0
    %308 = vmatpush.msra.mxu0 0.0
    %309 = vmatpush.msra.mxu0 0.0
    %310 = vmatpush.msra.mxu0 0.0
    %311 = vmatpush.msra.mxu0 0.0
    %312 = vmatpush.msra.mxu0 0.0
    %313 = vmatpush.msra.mxu0 0.0
    %314 = vmatpush.msra.mxu0 0.0
    %315 = vmatpush.msra.mxu0 0.0
    %316 = vmatpush.msra.mxu0 %v299
    %317 = vmatmul.f32.gmra.mxu0 %v133
    %v318 = vpop.f32.mrf.mxu0
    %v319 = vadd.f32 %v296, %v318
    %320 = vdwg.mxu0
    %s321 = scalar_lea.vmem %s6, 6
    %v322 = vld [vmem:[%s321] sm:$0x1]
    %v324 = vperm.slane %v322, 0
    %v326 = vadd.f32 %v319, %v324
    %vm327 = vcmp.gt.f32.partialorder %v326, 0.0
    %v328 = vmul.f32 %v326, 0.01
    %v329 = vsel %vm327, %v326, %v328
    %s330 = scalar_lea.vmem [#allocation2], 128
    %v331 = vld [vmem:[%s330] sm:$0xff]
    %v332 = vld [vmem:[%s330 + $0x8] sm:$0xff]
    %v333 = vld [vmem:[%s330 + $0x10] sm:$0xff]
    %v334 = vld [vmem:[%s330 + $0x18] sm:$0xff]
    %s335 = scalar_lea.vmem %s6, 7
    %v336 = vld [vmem:[%s335] sm:$0x1]
    %v338 = vperm.slane %v336, 0
    %v341 = vsel %vm176, %v329, 0
    %343 = vmatpush.msra.mxu0 0.0
    %344 = vmatpush.msra.mxu0 0.0
    %345 = vmatpush.msra.mxu0 0.0
    %346 = vmatpush.msra.mxu0 0.0
    %347 = vmatpush.msra.mxu0 0.0
    %348 = vmatpush.msra.mxu0 0.0
    %349 = vmatpush.msra.mxu0 0.0
    %350 = vmatpush.msra.mxu0 0.0
    %351 = vmatpush.msra.mxu0 0.0
    %352 = vmatpush.msra.mxu0 0.0
    %353 = vmatpush.msra.mxu0 0.0
    %354 = vmatpush.msra.mxu0 0.0
    %355 = vmatpush.msra.mxu0 %v334
    %356 = vmatpush.msra.mxu0 %v333
    %357 = vmatpush.msra.mxu0 %v332
    %358 = vmatpush.msra.mxu0 %v331
    %359 = vmatmul.f32.gmra.mxu0 %v341
    %v360 = vpop.f32.mrf.mxu0
    %v361 = vadd.f32 %v338, %v360
    %362 = vdwg.mxu0
    %vm363 = vcmp.gt.f32.partialorder %v361, 0.0
    %v364 = vmul.f32 %v361, 0.01
    %v365 = vsel %vm363, %v361, %v364
    %s366 = scalar_lea.vmem [#allocation2], 160
    %v367 = vld [vmem:[%s366] sm:$0xff]
    %v368 = vld [vmem:[%s366 + $0x8] sm:$0xff]
    %v369 = vld [vmem:[%s366 + $0x10] sm:$0xff]
    %v370 = vld [vmem:[%s366 + $0x18] sm:$0xff]
    %s371 = scalar_lea.vmem %s6, 8
    %v372 = vld [vmem:[%s371] sm:$0x1]
    %v374 = vperm.slane %v372, 0
    %v377 = vsel %vm176, %v365, 0
    %379 = vmatpush.msra.mxu0 0.0
    %380 = vmatpush.msra.mxu0 0.0
    %381 = vmatpush.msra.mxu0 0.0
    %382 = vmatpush.msra.mxu0 0.0
    %383 = vmatpush.msra.mxu0 0.0
    %384 = vmatpush.msra.mxu0 0.0
    %385 = vmatpush.msra.mxu0 0.0
    %386 = vmatpush.msra.mxu0 0.0
    %387 = vmatpush.msra.mxu0 0.0
    %388 = vmatpush.msra.mxu0 0.0
    %389 = vmatpush.msra.mxu0 0.0
    %390 = vmatpush.msra.mxu0 0.0
    %391 = vmatpush.msra.mxu0 %v370
    %392 = vmatpush.msra.mxu0 %v369
    %393 = vmatpush.msra.mxu0 %v368
    %394 = vmatpush.msra.mxu0 %v367
    %395 = vmatmul.f32.gmra.mxu0 %v377
    %v396 = vpop.f32.mrf.mxu0
    %v397 = vadd.f32 %v374, %v396
    %398 = vdwg.mxu0
    %vm399 = vcmp.gt.f32.partialorder %v397, 0.0
    %v400 = vmul.f32 %v397, 0.01
    %v401 = vsel %vm399, %v397, %v400
    %s402 = scalar_lea.vmem %s5, 64
    %v403 = vld [vmem:[%s402] sm:$0xff]
    %v404 = vld [vmem:[%s402 + $0x8] sm:$0xff]
    %v405 = vld [vmem:[%s402 + $0x10] sm:$0xff]
    %v406 = vld [vmem:[%s402 + $0x18] sm:$0xff]
    %s407 = scalar_lea.vmem %s7, 2
    %v408 = vld [vmem:[%s407] sm:$0x1]
    %v410 = vperm.slane %v408, 0
    %v413 = vsel %vm176, %v401, 0
    %415 = vmatpush.msra.mxu0 0.0
    %416 = vmatpush.msra.mxu0 0.0
    %417 = vmatpush.msra.mxu0 0.0
    %418 = vmatpush.msra.mxu0 0.0
    %419 = vmatpush.msra.mxu0 0.0
    %420 = vmatpush.msra.mxu0 0.0
    %421 = vmatpush.msra.mxu0 0.0
    %422 = vmatpush.msra.mxu0 0.0
    %423 = vmatpush.msra.mxu0 0.0
    %424 = vmatpush.msra.mxu0 0.0
    %425 = vmatpush.msra.mxu0 0.0
    %426 = vmatpush.msra.mxu0 0.0
    %427 = vmatpush.msra.mxu0 %v406
    %428 = vmatpush.msra.mxu0 %v405
    %429 = vmatpush.msra.mxu0 %v404
    %430 = vmatpush.msra.mxu0 %v403
    %431 = vmatmul.f32.gmra.mxu0 %v413
    %v432 = vpop.f32.mrf.mxu0
    %v433 = vadd.f32 %v410, %v432
    %434 = vdwg.mxu0
    %v435 = vmul.f32 %v270, 1.442695
    %v436 = vpow.pop %v435
    %v437 = vmul.f32 %v100, %v436
    %v438 = vadd.f32 %v437, %v433
    %v439 = vsel %vm131, %v270, 0.0
    %440 = vadd.xlane.f32.xlu0 %v439
    %v441 = vpop.xlane.xlu0 %440
    %v442 = vadd.f32 %v94, %v441
    %s443 = scalar_lea.vmem %s2, 2
    %v444 = vld [vmem:[%s443] sm:$0x3]
    %s445 = scalar_lea.vmem %s3, 4
    %v446 = vld [vmem:[%s445] sm:$0xf]
    %v448 = vsel %vm107, %v446, 0
    %450 = vmatpush.msra.mxu0 0.0
    %451 = vmatpush.msra.mxu0 0.0
    %452 = vmatpush.msra.mxu0 0.0
    %453 = vmatpush.msra.mxu0 0.0
    %454 = vmatpush.msra.mxu0 0.0
    %455 = vmatpush.msra.mxu0 0.0
    %456 = vmatpush.msra.mxu0 0.0
    %457 = vmatpush.msra.mxu0 0.0
    %458 = vmatpush.msra.mxu0 0.0
    %459 = vmatpush.msra.mxu0 0.0
    %460 = vmatpush.msra.mxu0 0.0
    %461 = vmatpush.msra.mxu0 0.0
    %462 = vmatpush.msra.mxu0 0.0
    %463 = vmatpush.msra.mxu0 0.0
    %464 = vmatpush.msra.mxu0 0.0
    %465 = vmatpush.msra.mxu0 %v448
    %466 = vmatmul.f32.gmra.mxu0 %v105
    %v467 = vpop.f32.mrf.mxu0
    %v468 = vadd.f32 0.0, %v467
    %469 = vdwg.mxu0
    %v471 = vsel %vm131, %v438, 0
    %v474 = vsel %vm135, %v444, 0
    %476 = vmatpush.msra.mxu0 0.0
    %477 = vmatpush.msra.mxu0 0.0
    %478 = vmatpush.msra.mxu0 0.0
    %479 = vmatpush.msra.mxu0 0.0
    %480 = vmatpush.msra.mxu0 0.0
    %481 = vmatpush.msra.mxu0 0.0
    %482 = vmatpush.msra.mxu0 0.0
    %483 = vmatpush.msra.mxu0 0.0
    %484 = vmatpush.msra.mxu0 0.0
    %485 = vmatpush.msra.mxu0 0.0
    %486 = vmatpush.msra.mxu0 0.0
    %487 = vmatpush.msra.mxu0 0.0
    %488 = vmatpush.msra.mxu0 0.0
    %489 = vmatpush.msra.mxu0 0.0
    %490 = vmatpush.msra.mxu0 0.0
    %491 = vmatpush.msra.mxu0 %v474
    %492 = vmatmul.f32.gmra.mxu0 %v471
    %v493 = vpop.f32.mrf.mxu0
    %v494 = vadd.f32 %v468, %v493
    %495 = vdwg.mxu0
    %s496 = scalar_lea.vmem %s6, 3
    %v497 = vld [vmem:[%s496] sm:$0x1]
    %v499 = vperm.slane %v497, 0
    %v501 = vadd.f32 %v494, %v499
    %vm502 = vcmp.gt.f32.partialorder %v501, 0.0
    %v503 = vmul.f32 %v501, 0.01
    %v504 = vsel %vm502, %v501, %v503
    %s505 = scalar_lea.vmem [#allocation2], 64
    %v506 = vld [vmem:[%s505] sm:$0xff]
    %v507 = vld [vmem:[%s505 + $0x8] sm:$0xff]
    %v508 = vld [vmem:[%s505 + $0x10] sm:$0xff]
    %v509 = vld [vmem:[%s505 + $0x18] sm:$0xff]
    %s510 = scalar_lea.vmem %s6, 4
    %v511 = vld [vmem:[%s510] sm:$0x1]
    %v513 = vperm.slane %v511, 0
    %v516 = vsel %vm176, %v504, 0
    %518 = vmatpush.msra.mxu0 0.0
    %519 = vmatpush.msra.mxu0 0.0
    %520 = vmatpush.msra.mxu0 0.0
    %521 = vmatpush.msra.mxu0 0.0
    %522 = vmatpush.msra.mxu0 0.0
    %523 = vmatpush.msra.mxu0 0.0
    %524 = vmatpush.msra.mxu0 0.0
    %525 = vmatpush.msra.mxu0 0.0
    %526 = vmatpush.msra.mxu0 0.0
    %527 = vmatpush.msra.mxu0 0.0
    %528 = vmatpush.msra.mxu0 0.0
    %529 = vmatpush.msra.mxu0 0.0
    %530 = vmatpush.msra.mxu0 %v509
    %531 = vmatpush.msra.mxu0 %v508
    %532 = vmatpush.msra.mxu0 %v507
    %533 = vmatpush.msra.mxu0 %v506
    %534 = vmatmul.f32.gmra.mxu0 %v516
    %v535 = vpop.f32.mrf.mxu0
    %v536 = vadd.f32 %v513, %v535
    %537 = vdwg.mxu0
    %vm538 = vcmp.gt.f32.partialorder %v536, 0.0
    %v539 = vmul.f32 %v536, 0.01
    %v540 = vsel %vm538, %v536, %v539
    %s541 = scalar_lea.vmem [#allocation2], 96
    %v542 = vld [vmem:[%s541] sm:$0xff]
    %v543 = vld [vmem:[%s541 + $0x8] sm:$0xff]
    %v544 = vld [vmem:[%s541 + $0x10] sm:$0xff]
    %v545 = vld [vmem:[%s541 + $0x18] sm:$0xff]
    %s546 = scalar_lea.vmem %s6, 5
    %v547 = vld [vmem:[%s546] sm:$0x1]
    %v549 = vperm.slane %v547, 0
    %v552 = vsel %vm176, %v540, 0
    %554 = vmatpush.msra.mxu0 0.0
    %555 = vmatpush.msra.mxu0 0.0
    %556 = vmatpush.msra.mxu0 0.0
    %557 = vmatpush.msra.mxu0 0.0
    %558 = vmatpush.msra.mxu0 0.0
    %559 = vmatpush.msra.mxu0 0.0
    %560 = vmatpush.msra.mxu0 0.0
    %561 = vmatpush.msra.mxu0 0.0
    %562 = vmatpush.msra.mxu0 0.0
    %563 = vmatpush.msra.mxu0 0.0
    %564 = vmatpush.msra.mxu0 0.0
    %565 = vmatpush.msra.mxu0 0.0
    %566 = vmatpush.msra.mxu0 %v545
    %567 = vmatpush.msra.mxu0 %v544
    %568 = vmatpush.msra.mxu0 %v543
    %569 = vmatpush.msra.mxu0 %v542
    %570 = vmatmul.f32.gmra.mxu0 %v552
    %v571 = vpop.f32.mrf.mxu0
    %v572 = vadd.f32 %v549, %v571
    %573 = vdwg.mxu0
    %vm574 = vcmp.gt.f32.partialorder %v572, 0.0
    %v575 = vmul.f32 %v572, 0.01
    %v576 = vsel %vm574, %v572, %v575
    %s577 = scalar_lea.vmem %s5, 32
    %v578 = vld [vmem:[%s577] sm:$0xff]
    %v579 = vld [vmem:[%s577 + $0x8] sm:$0xff]
    %v580 = vld [vmem:[%s577 + $0x10] sm:$0xff]
    %v581 = vld [vmem:[%s577 + $0x18] sm:$0xff]
    %s582 = scalar_lea.vmem %s7, 1
    %v583 = vld [vmem:[%s582] sm:$0x1]
    %v585 = vperm.slane %v583, 0
    %v588 = vsel %vm176, %v576, 0
    %590 = vmatpush.msra.mxu0 0.0
    %591 = vmatpush.msra.mxu0 0.0
    %592 = vmatpush.msra.mxu0 0.0
    %593 = vmatpush.msra.mxu0 0.0
    %594 = vmatpush.msra.mxu0 0.0
    %595 = vmatpush.msra.mxu0 0.0
    %596 = vmatpush.msra.mxu0 0.0
    %597 = vmatpush.msra.mxu0 0.0
    %598 = vmatpush.msra.mxu0 0.0
    %599 = vmatpush.msra.mxu0 0.0
    %600 = vmatpush.msra.mxu0 0.0
    %601 = vmatpush.msra.mxu0 0.0
    %602 = vmatpush.msra.mxu0 %v581
    %603 = vmatpush.msra.mxu0 %v580
    %604 = vmatpush.msra.mxu0 %v579
    %605 = vmatpush.msra.mxu0 %v578
    %606 = vmatmul.f32.gmra.mxu0 %v588
    %v607 = vpop.f32.mrf.mxu0
    %v608 = vadd.f32 %v585, %v607
    %609 = vdwg.mxu0
    %v610 = vtanh.pop %v608
    %s611 = scalar_lea.vmem %s2, 6
    %v612 = vld [vmem:[%s611] sm:$0x3]
    %s613 = scalar_lea.vmem %s3, 12
    %v614 = vld [vmem:[%s613] sm:$0xf]
    %v616 = vsel %vm107, %v614, 0
    %618 = vmatpush.msra.mxu0 0.0
    %619 = vmatpush.msra.mxu0 0.0
    %620 = vmatpush.msra.mxu0 0.0
    %621 = vmatpush.msra.mxu0 0.0
    %622 = vmatpush.msra.mxu0 0.0
    %623 = vmatpush.msra.mxu0 0.0
    %624 = vmatpush.msra.mxu0 0.0
    %625 = vmatpush.msra.mxu0 0.0
    %626 = vmatpush.msra.mxu0 0.0
    %627 = vmatpush.msra.mxu0 0.0
    %628 = vmatpush.msra.mxu0 0.0
    %629 = vmatpush.msra.mxu0 0.0
    %630 = vmatpush.msra.mxu0 0.0
    %631 = vmatpush.msra.mxu0 0.0
    %632 = vmatpush.msra.mxu0 0.0
    %633 = vmatpush.msra.mxu0 %v616
    %634 = vmatmul.f32.gmra.mxu0 %v105
    %v635 = vpop.f32.mrf.mxu0
    %v636 = vadd.f32 0.0, %v635
    %637 = vdwg.mxu0
    %v639 = vsel %vm135, %v612, 0
    %641 = vmatpush.msra.mxu0 0.0
    %642 = vmatpush.msra.mxu0 0.0
    %643 = vmatpush.msra.mxu0 0.0
    %644 = vmatpush.msra.mxu0 0.0
    %645 = vmatpush.msra.mxu0 0.0
    %646 = vmatpush.msra.mxu0 0.0
    %647 = vmatpush.msra.mxu0 0.0
    %648 = vmatpush.msra.mxu0 0.0
    %649 = vmatpush.msra.mxu0 0.0
    %650 = vmatpush.msra.mxu0 0.0
    %651 = vmatpush.msra.mxu0 0.0
    %652 = vmatpush.msra.mxu0 0.0
    %653 = vmatpush.msra.mxu0 0.0
    %654 = vmatpush.msra.mxu0 0.0
    %655 = vmatpush.msra.mxu0 0.0
    %656 = vmatpush.msra.mxu0 %v639
    %657 = vmatmul.f32.gmra.mxu0 %v471
    %v658 = vpop.f32.mrf.mxu0
    %v659 = vadd.f32 %v636, %v658
    %660 = vdwg.mxu0
    %s661 = scalar_lea.vmem %s6, 9
    %v662 = vld [vmem:[%s661] sm:$0x1]
    %v664 = vperm.slane %v662, 0
    %v666 = vadd.f32 %v659, %v664
    %vm667 = vcmp.gt.f32.partialorder %v666, 0.0
    %v668 = vmul.f32 %v666, 0.01
    %v669 = vsel %vm667, %v666, %v668
    %s670 = scalar_lea.vmem [#allocation2], 192
    %v671 = vld [vmem:[%s670] sm:$0xff]
    %v672 = vld [vmem:[%s670 + $0x8] sm:$0xff]
    %v673 = vld [vmem:[%s670 + $0x10] sm:$0xff]
    %v674 = vld [vmem:[%s670 + $0x18] sm:$0xff]
    %s675 = scalar_lea.vmem %s6, 10
    %v676 = vld [vmem:[%s675] sm:$0x1]
    %v678 = vperm.slane %v676, 0
    %v681 = vsel %vm176, %v669, 0
    %683 = vmatpush.msra.mxu0 0.0
    %684 = vmatpush.msra.mxu0 0.0
    %685 = vmatpush.msra.mxu0 0.0
    %686 = vmatpush.msra.mxu0 0.0
    %687 = vmatpush.msra.mxu0 0.0
    %688 = vmatpush.msra.mxu0 0.0
    %689 = vmatpush.msra.mxu0 0.0
    %690 = vmatpush.msra.mxu0 0.0
    %691 = vmatpush.msra.mxu0 0.0
    %692 = vmatpush.msra.mxu0 0.0
    %693 = vmatpush.msra.mxu0 0.0
    %694 = vmatpush.msra.mxu0 0.0
    %695 = vmatpush.msra.mxu0 %v674
    %696 = vmatpush.msra.mxu0 %v673
    %697 = vmatpush.msra.mxu0 %v672
    %698 = vmatpush.msra.mxu0 %v671
    %699 = vmatmul.f32.gmra.mxu0 %v681
    %v700 = vpop.f32.mrf.mxu0
    %v701 = vadd.f32 %v678, %v700
    %702 = vdwg.mxu0
    %vm703 = vcmp.gt.f32.partialorder %v701, 0.0
    %v704 = vmul.f32 %v701, 0.01
    %v705 = vsel %vm703, %v701, %v704
    %s706 = scalar_lea.vmem [#allocation2], 224
    %v707 = vld [vmem:[%s706] sm:$0xff]
    %v708 = vld [vmem:[%s706 + $0x8] sm:$0xff]
    %v709 = vld [vmem:[%s706 + $0x10] sm:$0xff]
    %v710 = vld [vmem:[%s706 + $0x18] sm:$0xff]
    %s711 = scalar_lea.vmem %s6, 11
    %v712 = vld [vmem:[%s711] sm:$0x1]
    %v714 = vperm.slane %v712, 0
    %v717 = vsel %vm176, %v705, 0
    %719 = vmatpush.msra.mxu0 0.0
    %720 = vmatpush.msra.mxu0 0.0
    %721 = vmatpush.msra.mxu0 0.0
    %722 = vmatpush.msra.mxu0 0.0
    %723 = vmatpush.msra.mxu0 0.0
    %724 = vmatpush.msra.mxu0 0.0
    %725 = vmatpush.msra.mxu0 0.0
    %726 = vmatpush.msra.mxu0 0.0
    %727 = vmatpush.msra.mxu0 0.0
    %728 = vmatpush.msra.mxu0 0.0
    %729 = vmatpush.msra.mxu0 0.0
    %730 = vmatpush.msra.mxu0 0.0
    %731 = vmatpush.msra.mxu0 %v710
    %732 = vmatpush.msra.mxu0 %v709
    %733 = vmatpush.msra.mxu0 %v708
    %734 = vmatpush.msra.mxu0 %v707
    %735 = vmatmul.f32.gmra.mxu0 %v717
    %v736 = vpop.f32.mrf.mxu0
    %v737 = vadd.f32 %v714, %v736
    %738 = vdwg.mxu0
    %vm739 = vcmp.gt.f32.partialorder %v737, 0.0
    %v740 = vmul.f32 %v737, 0.01
    %v741 = vsel %vm739, %v737, %v740
    %s742 = scalar_lea.vmem %s5, 96
    %v743 = vld [vmem:[%s742] sm:$0xff]
    %v744 = vld [vmem:[%s742 + $0x8] sm:$0xff]
    %v745 = vld [vmem:[%s742 + $0x10] sm:$0xff]
    %v746 = vld [vmem:[%s742 + $0x18] sm:$0xff]
    %s747 = scalar_lea.vmem %s7, 3
    %v748 = vld [vmem:[%s747] sm:$0x1]
    %v750 = vperm.slane %v748, 0
    %v753 = vsel %vm176, %v741, 0
    %755 = vmatpush.msra.mxu0 0.0
    %756 = vmatpush.msra.mxu0 0.0
    %757 = vmatpush.msra.mxu0 0.0
    %758 = vmatpush.msra.mxu0 0.0
    %759 = vmatpush.msra.mxu0 0.0
    %760 = vmatpush.msra.mxu0 0.0
    %761 = vmatpush.msra.mxu0 0.0
    %762 = vmatpush.msra.mxu0 0.0
    %763 = vmatpush.msra.mxu0 0.0
    %764 = vmatpush.msra.mxu0 0.0
    %765 = vmatpush.msra.mxu0 0.0
    %766 = vmatpush.msra.mxu0 0.0
    %767 = vmatpush.msra.mxu0 %v746
    %768 = vmatpush.msra.mxu0 %v745
    %769 = vmatpush.msra.mxu0 %v744
    %770 = vmatpush.msra.mxu0 %v743
    %771 = vmatmul.f32.gmra.mxu0 %v753
    %v772 = vpop.f32.mrf.mxu0
    %v773 = vadd.f32 %v750, %v772
    %774 = vdwg.mxu0
    %v775 = vmul.f32 %v610, 1.442695
    %v776 = vpow.pop %v775
    %v777 = vmul.f32 %v97, %v776
    %v778 = vadd.f32 %v777, %v773
    %v779 = vsel %vm131, %v610, 0.0
    %780 = vadd.xlane.f32.xlu0 %v779
    %v781 = vpop.xlane.xlu0 %780
    %v782 = vadd.f32 %v442, %v781
    %v783 = vld [vmem:[%s9] sm:$0x3]
    %s784 = scalar_lea.vmem %s9, 2
    %v785 = vld [vmem:[%s784] sm:$0x3]
    %v787 = vsel %vm131, %v778, 0
    %v790 = vsel %vm135, %v785, 0
    %792 = vmatpush.msra.mxu0 0.0
    %793 = vmatpush.msra.mxu0 0.0
    %794 = vmatpush.msra.mxu0 0.0
    %795 = vmatpush.msra.mxu0 0.0
    %796 = vmatpush.msra.mxu0 0.0
    %797 = vmatpush.msra.mxu0 0.0
    %798 = vmatpush.msra.mxu0 0.0
    %799 = vmatpush.msra.mxu0 0.0
    %800 = vmatpush.msra.mxu0 0.0
    %801 = vmatpush.msra.mxu0 0.0
    %802 = vmatpush.msra.mxu0 0.0
    %803 = vmatpush.msra.mxu0 0.0
    %804 = vmatpush.msra.mxu0 0.0
    %805 = vmatpush.msra.mxu0 0.0
    %806 = vmatpush.msra.mxu0 0.0
    %807 = vmatpush.msra.mxu0 %v790
    %808 = vmatmul.f32.gmra.mxu0 %v787
    %v809 = vpop.f32.mrf.mxu0
    %v810 = vadd.f32 0.0, %v809
    %811 = vdwg.mxu0
    %v813 = vsel %vm135, %v783, 0
    %815 = vmatpush.msra.mxu0 0.0
    %816 = vmatpush.msra.mxu0 0.0
    %817 = vmatpush.msra.mxu0 0.0
    %818 = vmatpush.msra.mxu0 0.0
    %819 = vmatpush.msra.mxu0 0.0
    %820 = vmatpush.msra.mxu0 0.0
    %821 = vmatpush.msra.mxu0 0.0
    %822 = vmatpush.msra.mxu0 0.0
    %823 = vmatpush.msra.mxu0 0.0
    %824 = vmatpush.msra.mxu0 0.0
    %825 = vmatpush.msra.mxu0 0.0
    %826 = vmatpush.msra.mxu0 0.0
    %827 = vmatpush.msra.mxu0 0.0
    %828 = vmatpush.msra.mxu0 0.0
    %829 = vmatpush.msra.mxu0 0.0
    %830 = vmatpush.msra.mxu0 %v813
    %831 = vmatmul.f32.gmra.mxu0 %v471
    %v832 = vpop.f32.mrf.mxu0
    %v833 = vadd.f32 %v810, %v832
    %834 = vdwg.mxu0
    %835 = vst.msk [vmem:[#allocation5] sm:$0xff] %vm103, %v833
    %vm836 = vcmask 39968
    %837 = vst.msk [vmem:[#allocation5] sm:$0xff] %vm836, %v782
    // Predicated region
    $region46: #{tpu_custom_call.1} parent=1 // pred_check
      _
    $region47: #{tpu_custom_call.1} parent=1 // pred_check_branch
      %839 = sbr.rel (0) target = $region49
    $region48: #{tpu_custom_call.1} parent=1 // pred_region
      %841 = vsyncadd [#allocation4], 0
      %s843 = sshll.u32 [#allocation5], 4
      %s844 = int_to_ptr.vmem [resolvable:$true] %s843
      %s845 = sshll.u32 %s10, 4
      %s846 = int_to_ptr.hbm [resolvable:$true] %s845
      %848 = dma.vmem_to_hbm [thread:$0]  %s844, 128, %s846, [#allocation4]
    $region49: #{tpu_custom_call.1} parent=1 // pred_fallthru
      _
    // Predicated region
    $region50: #{tpu_custom_call.1} parent=1 // pred_check
      _
    $region51: #{tpu_custom_call.1} parent=1 // pred_check_branch
      %850 = sbr.rel (0) target = $region53
    $region52: #{tpu_custom_call.1} parent=1 // pred_region
      %852 = dma.done [#allocation4], 128
    $region53: #{tpu_custom_call.1} parent=1 // pred_fallthru
      _
    %853 = vsyncpa [#allocation3], 1
    %854 = vsyncpa [#allocation4], 1

</llo_original>
